<compile_context>
chip_gen: v6e
topology: v6e:2x2x1
jax: 0.10.0
libtpu: 0.0.40
codegen_flags: <defaults>
</compile_context>

<pallas_src>
import numpy as np
import jax
import jax.numpy as jnp
from jax import lax
from jax.experimental import pallas as pl
from jax.experimental.pallas import tpu as pltpu

# ---------------- hyperparameters (small, consistent with the tutorial) ----------------
src_len = 5          # vocab size == sequence length in the original tutorial
SEQ = 5              # sequence length (pos indices hardcoded [[1,2,3,4,0]])
BATCH = 2
d_model = 32
d_ff = 64
d_k = 8
d_v = 8
n_heads = 4
n_layers = 2

_SCALE = float(1.0 / np.sqrt(d_k))
_EPS = 1e-5                      # PyTorch LayerNorm default
_BS = BATCH * SEQ                # 10 flat tokens
_HD = n_heads * d_k              # 32
_ROWS = n_heads * _BS            # 40 head-blocked attention rows per layer
_OUT_ROWS = 16                   # sublane-padded output rows
_CONST_ROWS = 16                 # [src_emb (5) | pos_full (10) | zero pad (1)]

# weight-slab layout (n_layers, 40, 768): rows 0:32 = weights, row 32/33 = bias/LN vectors,
# rows 34:40 = zero padding. Every column segment starts on a 128-lane boundary.
_W_ROWS = 40
_COL_WQ = 0
_COL_WK = 128
_COL_WV = 256
_QKV_COLS = 384                  # width of the zero-padded fused QKV block
_COL_WO = 384
_COL_W1 = 512
_COL_W2T = 640                   # W2 stored transposed: (d_model, d_ff)
_W_COLS = 768
_BIAS1 = 32                      # row 32: [bq@0 | bk@128 | bv@256 | bo@384 | ln1_g@512 | ln1_b@640]
_BIAS2 = 33                      # row 33: [b1@0 | b2@128 | ln2_g@256 | ln2_b@384]
_B1_BO = 384
_B1_LN1G = 512
_B1_LN1B = 640
_B2_B1 = 0
_B2_B2 = 128
_B2_LN2G = 256
_B2_LN2B = 384


# ---------------- Pallas kernel: embedding + mask + both encoder layers ----------------
def fused_encoder_kernel(ids_ref, const_ref, w_ref, out_ref, attn_ref):
    # ids packed twice in one tiny tile (row 0 = lane orientation, column 0 = sublane
    # orientation) so neither the one-hot nor the pad mask needs an in-kernel transpose.
    ids_lane = ids_ref[0:1, 0:_BS]               # (1, B*S)  key / pad-mask orientation
    ids_col = ids_ref[0:_BS, 0:1]                # (B*S, 1)  query / token orientation

    # ---- embedding lookup + positional add as ONE matmul --------------------------------
    # aug[t, c] = 1 if c == ids[t] (vocab one-hot) or c == t + src_len (identity -> pos row)
    col16 = lax.broadcasted_iota(jnp.int32, (_BS, _CONST_ROWS), 1)
    row16 = lax.broadcasted_iota(jnp.int32, (_BS, _CONST_ROWS), 0)
    aug = jnp.logical_or(col16 == ids_col,
                         col16 == row16 + src_len).astype(jnp.float32)     # (10, 16)
    x = jnp.dot(aug, const_ref[...], preferred_element_type=jnp.float32,
                precision=lax.Precision.DEFAULT)                           # (10, 32)

    # ---- layer-invariant masks (hoisted out of the layer loop) --------------------------
    # head_mask[r, d] = 1 where lane d belongs to the head of row block r // (B*S)
    lane = lax.broadcasted_iota(jnp.int32, (_BS, _HD), 1)
    head_mask = jnp.concatenate(
        [jnp.logical_and(lane >= h * d_k, lane < (h + 1) * d_k).astype(jnp.float32)
         for h in range(n_heads)], axis=0)                                 # (40, 32)

    # score masking for the head-blocked (40, 10) score matrix:
    #   * key-pad positions (token id == 0) -> -1e9 (exactly PyTorch's masked_fill value)
    #   * cross-batch key columns           -> -2e9 (strictly lower, so even a fully padded
    #     row degenerates to uniform over its OWN batch's pad keys, matching PyTorch; the
    #     cross-batch weights underflow to exactly 0 after the max-subtracted exp).
    t_half = lax.broadcasted_iota(jnp.int32, (_BS, _BS), 0) >= SEQ
    c_half = lax.broadcasted_iota(jnp.int32, (_BS, _BS), 1) >= SEQ
    cross10 = jnp.logical_xor(t_half, c_half).astype(jnp.float32)          # (10, 10)
    cross = jnp.concatenate([cross10] * n_heads, axis=0)                   # (40, 10)
    pad = (ids_lane == 0).astype(jnp.float32)                              # (1, 10)
    mask_bool = (cross + pad) > 0.0                                        # (40, 10)
    fill = jnp.where(cross > 0.0, jnp.float32(-2e9), jnp.float32(-1e9))    # (40, 10)

    for l in range(n_layers):                      # static unroll; x stays resident on-chip
        # bias / LayerNorm vectors (all 128-lane-aligned slices of the slab's bias rows)
        bqkv = w_ref[l, _BIAS1:_BIAS1 + 1, 0:_QKV_COLS]                    # (1, 384)
        bo = w_ref[l, _BIAS1:_BIAS1 + 1, _B1_BO:_B1_BO + d_model]
        ln1_g = w_ref[l, _BIAS1:_BIAS1 + 1, _B1_LN1G:_B1_LN1G + d_model]
        ln1_b = w_ref[l, _BIAS1:_BIAS1 + 1, _B1_LN1B:_B1_LN1B + d_model]
        b1 = w_ref[l, _BIAS2:_BIAS2 + 1, _B2_B1:_B2_B1 + d_ff]
        b2 = w_ref[l, _BIAS2:_BIAS2 + 1, _B2_B2:_B2_B2 + d_model]
        ln2_g = w_ref[l, _BIAS2:_BIAS2 + 1, _B2_LN2G:_B2_LN2G + d_model]
        ln2_b = w_ref[l, _BIAS2:_BIAS2 + 1, _B2_LN2B:_B2_LN2B + d_model]

        # fused QKV projection (one MXU pass); 1/sqrt(d_k) folded into W_Q / b_Q at pack
        # time; Q/K/V land at 128-aligned output lanes so the slices below are free views.
        qkv = jnp.dot(x, w_ref[l, 0:d_model, 0:_QKV_COLS],
                      preferred_element_type=jnp.float32,
                      precision=lax.Precision.DEFAULT) + bqkv              # (10, 384)
        q = qkv[:, _COL_WQ:_COL_WQ + _HD]                                  # (10, 32)
        k = qkv[:, _COL_WK:_COL_WK + _HD]
        v = qkv[:, _COL_WV:_COL_WV + _HD]

        # head-blocked attention: replicate Q per head and mask its lanes, then ONE
        # (40,32)x(32,10) matmul for all heads'/batches' scores and ONE (40,10)x(10,32)
        # matmul for the context.  No 4-D transposes, no per-head loops.
        q_blk = jnp.concatenate([q] * n_heads, axis=0) * head_mask         # (40, 32)
        scores = lax.dot_general(q_blk, k, (((1,), (1,)), ((), ())),
                                 preferred_element_type=jnp.float32,
                                 precision=lax.Precision.DEFAULT)          # (40, 10)
        scores = jnp.where(mask_bool, fill, scores)
        scores = scores - jnp.max(scores, axis=-1, keepdims=True)
        e = jnp.exp(scores)
        attn = e / jnp.sum(e, axis=-1, keepdims=True)        # exact division (correctness)
        attn_ref[l * _ROWS:(l + 1) * _ROWS, :] = attn        # dense (40, 10) block store

        ctxb = jnp.dot(attn, v, preferred_element_type=jnp.float32,
                       precision=lax.Precision.DEFAULT) * head_mask        # (40, 32)
        ctx = (ctxb[0:_BS] + ctxb[_BS:2 * _BS]
               + ctxb[2 * _BS:3 * _BS] + ctxb[3 * _BS:4 * _BS])            # (10, 32)

        # output projection + residual + LayerNorm
        attn_out = jnp.dot(ctx, w_ref[l, 0:d_model, _COL_WO:_COL_WO + d_model],
                           preferred_element_type=jnp.float32,
                           precision=lax.Precision.DEFAULT) + bo
        h1 = attn_out + x
        mu1 = jnp.mean(h1, axis=-1, keepdims=True)
        var1 = jnp.mean((h1 - mu1) ** 2, axis=-1, keepdims=True)
        h1 = (h1 - mu1) * lax.rsqrt(var1 + _EPS) * ln1_g + ln1_b

        # position-wise FFN (Conv1d kernel-size 1 == linear) + residual + LayerNorm
        f = jnp.dot(h1, w_ref[l, 0:d_model, _COL_W1:_COL_W1 + d_ff],
                    preferred_element_type=jnp.float32,
                    precision=lax.Precision.DEFAULT) + b1
        f = jnp.maximum(f, 0.0)
        # second FFN matmul against W2^T stored in the 32-row slab (trans_b contraction)
        f = lax.dot_general(f, w_ref[l, 0:d_model, _COL_W2T:_COL_W2T + d_ff],
                            (((1,), (1,)), ((), ())),
                            preferred_element_type=jnp.float32,
                            precision=lax.Precision.DEFAULT) + b2
        h2 = f + h1
        mu2 = jnp.mean(h2, axis=-1, keepdims=True)
        var2 = jnp.mean((h2 - mu2) ** 2, axis=-1, keepdims=True)
        x = (h2 - mu2) * lax.rsqrt(var2 + _EPS) * ln2_g + ln2_b

    # sublane-pad the encoder output to 16 rows so the final store is sublane-dense
    out_ref[...] = jnp.concatenate(
        [x, jnp.zeros((_OUT_ROWS - _BS, d_model), jnp.float32)], axis=0)


@jax.jit
def transformer_encoder(encoder_input, const_slab, w_slab):
    """encoder_input: (B, S) int32 token ids; 0 = pad.
    Returns (out (B,S,D), attn (L,B,H,S,S))."""
    ids_flat = encoder_input.reshape(_BS).astype(jnp.int32)
    # pack ids in both orientations into one tiny int32 tile (no in-kernel transpose needed)
    ids_mixed = jnp.zeros((16, 16), jnp.int32)
    ids_mixed = ids_mixed.at[0, 0:_BS].set(ids_flat)
    ids_mixed = ids_mixed.at[0:_BS, 0].set(ids_flat)

    out_pad, attn_flat = pl.pallas_call(
        fused_encoder_kernel,
        out_shape=(
            jax.ShapeDtypeStruct((_OUT_ROWS, d_model), jnp.float32),
            jax.ShapeDtypeStruct((n_layers * _ROWS, _BS), jnp.float32),
        ),
        in_specs=[pl.BlockSpec(memory_space=pltpu.MemorySpace.VMEM)] * 3,
        out_specs=(pl.BlockSpec(memory_space=pltpu.MemorySpace.VMEM),
                   pl.BlockSpec(memory_space=pltpu.MemorySpace.VMEM)),
    )(ids_mixed, const_slab, w_slab)

    out = out_pad[:_BS].reshape(BATCH, SEQ, d_model)
    # attn rows are ordered (layer, head, batch, query); columns are flat keys (batch', key)
    a = attn_flat.reshape(n_layers, n_heads, BATCH, SEQ, BATCH, SEQ)
    attn = jnp.stack([a[:, :, b, :, b, :] for b in range(BATCH)], axis=2)   # (L,H,B,S,S)
    attn = jnp.transpose(attn, (0, 2, 1, 3, 4))                             # (L,B,H,S,S)
    return out, attn


# ---------------- parameter init + packing (plain JAX / numpy, done once) ----------------
def get_sinusoid_encoding_table(n_position, dm):
    pos = np.arange(n_position)[:, None].astype(np.float64)
    hid = np.arange(dm)[None, :]
    angle = pos / np.power(10000, 2 * (hid // 2) / dm)
    table = np.array(angle)
    table[:, 0::2] = np.sin(table[:, 0::2])
    table[:, 1::2] = np.cos(table[:, 1::2])
    return jnp.asarray(table, dtype=jnp.float32)


def init_params(key):
    def dense(k, fan_in, fan_out):
        return 0.02 * jax.random.normal(k, (fan_in, fan_out), dtype=jnp.float32)

    def vec(k, n):
        return 0.02 * jax.random.normal(k, (n,), dtype=jnp.float32)

    keys = jax.random.split(key, 1 + n_layers * 12)
    src_emb_w = 0.02 * jax.random.normal(keys[0], (src_len, d_model), dtype=jnp.float32)
    pos_table = get_sinusoid_encoding_table(src_len + 1, d_model)
    # positions hardcoded to [[1,2,3,4,0]] in the reference; pre-gather + tile (constant)
    pos_idx = np.array([1, 2, 3, 4, 0], dtype=np.int32)
    pos_full = jnp.tile(pos_table[pos_idx], (BATCH, 1))                    # (B*S, D)
    const_slab = jnp.concatenate(
        [src_emb_w, pos_full,
         jnp.zeros((_CONST_ROWS - src_len - _BS, d_model), jnp.float32)], axis=0)  # (16,32)

    slabs = []
    for l in range(n_layers):
        ks = keys[1 + 12 * l: 1 + 12 * (l + 1)]
        wq, bq = dense(ks[0], d_model, d_k * n_heads), vec(ks[1], d_k * n_heads)
        wk, bk = dense(ks[2], d_model, d_k * n_heads), vec(ks[3], d_k * n_heads)
        wv, bv = dense(ks[4], d_model, d_v * n_heads), vec(ks[5], d_v * n_heads)
        wo, bo = dense(ks[6], n_heads * d_v, d_model), vec(ks[7], d_model)
        w1, b1 = dense(ks[8], d_model, d_ff), vec(ks[9], d_ff)
        w2, b2 = dense(ks[10], d_ff, d_model), vec(ks[11], d_model)
        ln1_g = np.ones((d_model,), np.float32); ln1_b = np.zeros((d_model,), np.float32)
        ln2_g = np.ones((d_model,), np.float32); ln2_b = np.zeros((d_model,), np.float32)

        s = np.zeros((_W_ROWS, _W_COLS), np.float32)
        # weight rows 0:32 (1/sqrt(d_k) attention scale folded into W_Q / b_Q)
        s[0:d_model, _COL_WQ:_COL_WQ + _HD] = np.asarray(wq) * _SCALE
        s[0:d_model, _COL_WK:_COL_WK + _HD] = np.asarray(wk)
        s[0:d_model, _COL_WV:_COL_WV + _HD] = np.asarray(wv)
        s[0:d_model, _COL_WO:_COL_WO + d_model] = np.asarray(wo)
        s[0:d_model, _COL_W1:_COL_W1 + d_ff] = np.asarray(w1)
        s[0:d_model, _COL_W2T:_COL_W2T + d_ff] = np.asarray(w2).T
        # bias / LayerNorm rows (all segments 128-lane aligned)
        s[_BIAS1, _COL_WQ:_COL_WQ + _HD] = np.asarray(bq) * _SCALE
        s[_BIAS1, _COL_WK:_COL_WK + _HD] = np.asarray(bk)
        s[_BIAS1, _COL_WV:_COL_WV + _HD] = np.asarray(bv)
        s[_BIAS1, _B1_BO:_B1_BO + d_model] = np.asarray(bo)
        s[_BIAS1, _B1_LN1G:_B1_LN1G + d_model] = ln1_g
        s[_BIAS1, _B1_LN1B:_B1_LN1B + d_model] = ln1_b
        s[_BIAS2, _B2_B1:_B2_B1 + d_ff] = np.asarray(b1)
        s[_BIAS2, _B2_B2:_B2_B2 + d_model] = np.asarray(b2)
        s[_BIAS2, _B2_LN2G:_B2_LN2G + d_model] = ln2_g
        s[_BIAS2, _B2_LN2B:_B2_LN2B + d_model] = ln2_b
        slabs.append(s)

    w_slab = jnp.asarray(np.stack(slabs))                                  # (L, 40, 768)
    return const_slab, w_slab


if __name__ == "__main__":
    key = jax.random.PRNGKey(0)
    pkey, ikey = jax.random.split(key)
    const_slab, w_slab = init_params(pkey)

    # deterministic token ids in [0, src_len); force at least one pad (0) per row
    encoder_input = jax.random.randint(ikey, (BATCH, SEQ), 0, src_len, dtype=jnp.int32)
    encoder_input = encoder_input.at[:, -1].set(0)

    out, attn = transformer_encoder(encoder_input, const_slab, w_slab)
    out = jax.block_until_ready(out)
    attn = jax.block_until_ready(attn)
    attns = [attn[l] for l in range(n_layers)]   # per-layer (B, H, S, S), as in PyTorch

    assert out.shape == (BATCH, SEQ, d_model)
    assert all(a.shape == (BATCH, n_heads, SEQ, SEQ) for a in attns)
    assert bool(jnp.all(jnp.isfinite(out)))
    assert bool(jnp.all(jnp.isfinite(attn)))
    # softmax rows must sum to 1 (cross-batch / masked weights underflow to exactly 0)
    assert bool(jnp.allclose(attn.sum(-1), 1.0, atol=1e-3))
    print("KERNEL_OK")
</pallas_src>

<mosaic_0001>
module attributes {stable_mosaic.version = 11 : i64} {
  func.func @fused_encoder_kernel(%arg0: memref<16x16xi32, #tpu.memory_space<vmem>>, %arg1: memref<16x32xf32, #tpu.memory_space<vmem>>, %arg2: memref<2x40x768xf32, #tpu.memory_space<vmem>>, %arg3: memref<16x32xf32, #tpu.memory_space<vmem>>, %arg4: memref<80x10xf32, #tpu.memory_space<vmem>>) attributes {dimension_semantics = [], scalar_prefetch = 0 : i64, scratch_operands = 0 : i64, tpu.core_type = #tpu.core_type<tc>} {
    %c0 = arith.constant 0 : index
    %c0_0 = arith.constant 0 : index
    %0 = vector.load %arg0[%c0, %c0_0] : memref<16x16xi32, #tpu.memory_space<vmem>>, vector<1x10xi32>
    %c0_1 = arith.constant 0 : index
    %c0_2 = arith.constant 0 : index
    %1 = vector.load %arg0[%c0_1, %c0_2] : memref<16x16xi32, #tpu.memory_space<vmem>>, vector<10x1xi32>
    %2 = tpu.iota {dimensions = array<i32: 1>} : vector<10x16xi32>
    %3 = tpu.iota {dimensions = array<i32: 0>} : vector<10x16xi32>
    %4 = vector.broadcast %1 : vector<10x1xi32> to vector<10x16xi32>
    %5 = arith.cmpi eq, %2, %4 : vector<10x16xi32>
    %c5_i32 = arith.constant 5 : i32
    %6 = vector.broadcast %c5_i32 : i32 to vector<10x16xi32>
    %7 = arith.addi %3, %6 : vector<10x16xi32>
    %8 = arith.cmpi eq, %2, %7 : vector<10x16xi32>
    %9 = arith.ori %5, %8 : vector<10x16xi1>
    %10 = arith.extui %9 : vector<10x16xi1> to vector<10x16xi32>
    %11 = arith.sitofp %10 : vector<10x16xi32> to vector<10x16xf32>
    %c0_3 = arith.constant 0 : index
    %c0_4 = arith.constant 0 : index
    %12 = vector.load %arg1[%c0_3, %c0_4] : memref<16x32xf32, #tpu.memory_space<vmem>>, vector<16x32xf32>
    %cst = arith.constant dense<0.000000e+00> : vector<10x32xf32>
    %13 = tpu.matmul %11, %12, %cst {dimension_numbers = #tpu.dot_dimension_numbers<[1], [0], [0], [1], [0, 0, 1, 1], [], []>} : vector<10x16xf32>, vector<16x32xf32>, vector<10x32xf32> -> vector<10x32xf32>
    %14 = tpu.iota {dimensions = array<i32: 1>} : vector<10x32xi32>
    %c0_i32 = arith.constant 0 : i32
    %15 = vector.broadcast %c0_i32 : i32 to vector<10x32xi32>
    %16 = arith.cmpi sge, %14, %15 : vector<10x32xi32>
    %c8_i32 = arith.constant 8 : i32
    %17 = vector.broadcast %c8_i32 : i32 to vector<10x32xi32>
    %18 = arith.cmpi slt, %14, %17 : vector<10x32xi32>
    %19 = arith.andi %16, %18 : vector<10x32xi1>
    %20 = arith.extui %19 : vector<10x32xi1> to vector<10x32xi32>
    %21 = arith.sitofp %20 : vector<10x32xi32> to vector<10x32xf32>
    %c8_i32_5 = arith.constant 8 : i32
    %22 = vector.broadcast %c8_i32_5 : i32 to vector<10x32xi32>
    %23 = arith.cmpi sge, %14, %22 : vector<10x32xi32>
    %c16_i32 = arith.constant 16 : i32
    %24 = vector.broadcast %c16_i32 : i32 to vector<10x32xi32>
    %25 = arith.cmpi slt, %14, %24 : vector<10x32xi32>
    %26 = arith.andi %23, %25 : vector<10x32xi1>
    %27 = arith.extui %26 : vector<10x32xi1> to vector<10x32xi32>
    %28 = arith.sitofp %27 : vector<10x32xi32> to vector<10x32xf32>
    %c16_i32_6 = arith.constant 16 : i32
    %29 = vector.broadcast %c16_i32_6 : i32 to vector<10x32xi32>
    %30 = arith.cmpi sge, %14, %29 : vector<10x32xi32>
    %c24_i32 = arith.constant 24 : i32
    %31 = vector.broadcast %c24_i32 : i32 to vector<10x32xi32>
    %32 = arith.cmpi slt, %14, %31 : vector<10x32xi32>
    %33 = arith.andi %30, %32 : vector<10x32xi1>
    %34 = arith.extui %33 : vector<10x32xi1> to vector<10x32xi32>
    %35 = arith.sitofp %34 : vector<10x32xi32> to vector<10x32xf32>
    %c24_i32_7 = arith.constant 24 : i32
    %36 = vector.broadcast %c24_i32_7 : i32 to vector<10x32xi32>
    %37 = arith.cmpi sge, %14, %36 : vector<10x32xi32>
    %c32_i32 = arith.constant 32 : i32
    %38 = vector.broadcast %c32_i32 : i32 to vector<10x32xi32>
    %39 = arith.cmpi slt, %14, %38 : vector<10x32xi32>
    %40 = arith.andi %37, %39 : vector<10x32xi1>
    %41 = arith.extui %40 : vector<10x32xi1> to vector<10x32xi32>
    %42 = arith.sitofp %41 : vector<10x32xi32> to vector<10x32xf32>
    %43 = tpu.concatenate %21, %28, %35, %42 in 0 : vector<10x32xf32>, vector<10x32xf32>, vector<10x32xf32>, vector<10x32xf32> -> vector<40x32xf32>
    %44 = tpu.iota {dimensions = array<i32: 0>} : vector<10x10xi32>
    %c5_i32_8 = arith.constant 5 : i32
    %45 = vector.broadcast %c5_i32_8 : i32 to vector<10x10xi32>
    %46 = arith.cmpi sge, %44, %45 : vector<10x10xi32>
    %47 = tpu.iota {dimensions = array<i32: 1>} : vector<10x10xi32>
    %c5_i32_9 = arith.constant 5 : i32
    %48 = vector.broadcast %c5_i32_9 : i32 to vector<10x10xi32>
    %49 = arith.cmpi sge, %47, %48 : vector<10x10xi32>
    %50 = arith.xori %46, %49 : vector<10x10xi1>
    %51 = arith.extui %50 : vector<10x10xi1> to vector<10x10xi32>
    %52 = arith.sitofp %51 : vector<10x10xi32> to vector<10x10xf32>
    %53 = tpu.concatenate %52, %52, %52, %52 in 0 : vector<10x10xf32>, vector<10x10xf32>, vector<10x10xf32>, vector<10x10xf32> -> vector<40x10xf32>
    %c0_i32_10 = arith.constant 0 : i32
    %54 = vector.broadcast %c0_i32_10 : i32 to vector<1x10xi32>
    %55 = arith.cmpi eq, %0, %54 : vector<1x10xi32>
    %56 = arith.extui %55 : vector<1x10xi1> to vector<1x10xi32>
    %57 = arith.sitofp %56 : vector<1x10xi32> to vector<1x10xf32>
    %58 = vector.broadcast %57 : vector<1x10xf32> to vector<40x10xf32>
    %59 = arith.addf %53, %58 : vector<40x10xf32>
    %cst_11 = arith.constant 0.000000e+00 : f32
    %60 = vector.broadcast %cst_11 : f32 to vector<40x10xf32>
    %61 = arith.cmpf ogt, %59, %60 : vector<40x10xf32>
    %cst_12 = arith.constant 0.000000e+00 : f32
    %62 = vector.broadcast %cst_12 : f32 to vector<40x10xf32>
    %63 = arith.cmpf ogt, %53, %62 : vector<40x10xf32>
    %cst_13 = arith.constant -2.000000e+09 : f32
    %cst_14 = arith.constant -1.000000e+09 : f32
    %64 = vector.broadcast %cst_13 : f32 to vector<40x10xf32>
    %65 = vector.broadcast %cst_14 : f32 to vector<40x10xf32>
    %66 = arith.select %63, %64, %65 : vector<40x10xi1>, vector<40x10xf32>
    %c0_15 = arith.constant 0 : index
    %c32 = arith.constant 32 : index
    %c0_16 = arith.constant 0 : index
    %67 = vector.load %arg2[%c0_15, %c32, %c0_16] : memref<2x40x768xf32, #tpu.memory_space<vmem>>, vector<1x1x384xf32>
    %68 = vector.shape_cast %67 : vector<1x1x384xf32> to vector<1x384xf32>
    %c0_17 = arith.constant 0 : index
    %c32_18 = arith.constant 32 : index
    %c384 = arith.constant 384 : index
    %69 = vector.load %arg2[%c0_17, %c32_18, %c384] : memref<2x40x768xf32, #tpu.memory_space<vmem>>, vector<1x1x32xf32>
    %70 = vector.shape_cast %69 : vector<1x1x32xf32> to vector<1x32xf32>
    %c0_19 = arith.constant 0 : index
    %c32_20 = arith.constant 32 : index
    %c512 = arith.constant 512 : index
    %71 = vector.load %arg2[%c0_19, %c32_20, %c512] : memref<2x40x768xf32, #tpu.memory_space<vmem>>, vector<1x1x32xf32>
    %72 = vector.shape_cast %71 : vector<1x1x32xf32> to vector<1x32xf32>
    %c0_21 = arith.constant 0 : index
    %c32_22 = arith.constant 32 : index
    %c640 = arith.constant 640 : index
    %73 = vector.load %arg2[%c0_21, %c32_22, %c640] : memref<2x40x768xf32, #tpu.memory_space<vmem>>, vector<1x1x32xf32>
    %74 = vector.shape_cast %73 : vector<1x1x32xf32> to vector<1x32xf32>
    %c0_23 = arith.constant 0 : index
    %c33 = arith.constant 33 : index
    %c0_24 = arith.constant 0 : index
    %75 = vector.load %arg2[%c0_23, %c33, %c0_24] : memref<2x40x768xf32, #tpu.memory_space<vmem>>, vector<1x1x64xf32>
    %76 = vector.shape_cast %75 : vector<1x1x64xf32> to vector<1x64xf32>
    %c0_25 = arith.constant 0 : index
    %c33_26 = arith.constant 33 : index
    %c128 = arith.constant 128 : index
    %77 = vector.load %arg2[%c0_25, %c33_26, %c128] : memref<2x40x768xf32, #tpu.memory_space<vmem>>, vector<1x1x32xf32>
    %78 = vector.shape_cast %77 : vector<1x1x32xf32> to vector<1x32xf32>
    %c0_27 = arith.constant 0 : index
    %c33_28 = arith.constant 33 : index
    %c256 = arith.constant 256 : index
    %79 = vector.load %arg2[%c0_27, %c33_28, %c256] : memref<2x40x768xf32, #tpu.memory_space<vmem>>, vector<1x1x32xf32>
    %80 = vector.shape_cast %79 : vector<1x1x32xf32> to vector<1x32xf32>
    %c0_29 = arith.constant 0 : index
    %c33_30 = arith.constant 33 : index
    %c384_31 = arith.constant 384 : index
    %81 = vector.load %arg2[%c0_29, %c33_30, %c384_31] : memref<2x40x768xf32, #tpu.memory_space<vmem>>, vector<1x1x32xf32>
    %82 = vector.shape_cast %81 : vector<1x1x32xf32> to vector<1x32xf32>
    %c0_32 = arith.constant 0 : index
    %c0_33 = arith.constant 0 : index
    %c0_34 = arith.constant 0 : index
    %83 = vector.load %arg2[%c0_32, %c0_33, %c0_34] : memref<2x40x768xf32, #tpu.memory_space<vmem>>, vector<1x32x384xf32>
    %84 = vector.shape_cast %83 : vector<1x32x384xf32> to vector<32x384xf32>
    %cst_35 = arith.constant dense<0.000000e+00> : vector<10x384xf32>
    %85 = tpu.matmul %13, %84, %cst_35 {dimension_numbers = #tpu.dot_dimension_numbers<[1], [0], [0], [1], [0, 0, 1, 1], [], []>} : vector<10x32xf32>, vector<32x384xf32>, vector<10x384xf32> -> vector<10x384xf32>
    %86 = vector.broadcast %68 : vector<1x384xf32> to vector<10x384xf32>
    %87 = arith.addf %85, %86 : vector<10x384xf32>
    %88 = vector.extract_strided_slice %87 {offsets = [0, 0], sizes = [10, 32], strides = [1, 1]} : vector<10x384xf32> to vector<10x32xf32>
    %89 = vector.extract_strided_slice %87 {offsets = [0, 128], sizes = [10, 32], strides = [1, 1]} : vector<10x384xf32> to vector<10x32xf32>
    %90 = vector.extract_strided_slice %87 {offsets = [0, 256], sizes = [10, 32], strides = [1, 1]} : vector<10x384xf32> to vector<10x32xf32>
    %91 = tpu.concatenate %88, %88, %88, %88 in 0 : vector<10x32xf32>, vector<10x32xf32>, vector<10x32xf32>, vector<10x32xf32> -> vector<40x32xf32>
    %92 = arith.mulf %91, %43 : vector<40x32xf32>
    %cst_36 = arith.constant dense<0.000000e+00> : vector<40x10xf32>
    %93 = tpu.matmul %92, %89, %cst_36 {dimension_numbers = #tpu.dot_dimension_numbers<[1], [1], [0], [0], [0, 0, 1, 0], [], []>} : vector<40x32xf32>, vector<10x32xf32>, vector<40x10xf32> -> vector<40x10xf32>
    %94 = arith.select %61, %66, %93 : vector<40x10xi1>, vector<40x10xf32>
    %cst_37 = arith.constant dense<0xFF800000> : vector<40xf32>
    %95 = vector.multi_reduction <maximumf>, %94, %cst_37 [1] : vector<40x10xf32> to vector<40xf32>
    %96 = vector.shape_cast %95 : vector<40xf32> to vector<40x1xf32>
    %97 = vector.broadcast %96 : vector<40x1xf32> to vector<40x10xf32>
    %98 = arith.subf %94, %97 : vector<40x10xf32>
    %99 = math.exp %98 : vector<40x10xf32>
    %cst_38 = arith.constant dense<0.000000e+00> : vector<40xf32>
    %100 = vector.multi_reduction <add>, %99, %cst_38 [1] : vector<40x10xf32> to vector<40xf32>
    %101 = vector.shape_cast %100 : vector<40xf32> to vector<40x1xf32>
    %102 = vector.broadcast %101 : vector<40x1xf32> to vector<40x10xf32>
    %103 = arith.divf %99, %102 : vector<40x10xf32>
    %c0_39 = arith.constant 0 : index
    %c0_40 = arith.constant 0 : index
    %104 = vector.load %arg4[%c0_39, %c0_40] : memref<80x10xf32, #tpu.memory_space<vmem>>, vector<40x10xf32>
    tpu.vector_store %arg4[%c0_39, %c0_40], %103 {strides = array<i32>} : memref<80x10xf32, #tpu.memory_space<vmem>>, vector<40x10xf32>,
    %cst_41 = arith.constant dense<0.000000e+00> : vector<40x32xf32>
    %105 = tpu.matmul %103, %90, %cst_41 {dimension_numbers = #tpu.dot_dimension_numbers<[1], [0], [0], [1], [0, 0, 1, 1], [], []>} : vector<40x10xf32>, vector<10x32xf32>, vector<40x32xf32> -> vector<40x32xf32>
    %106 = arith.mulf %105, %43 : vector<40x32xf32>
    %107 = vector.extract_strided_slice %106 {offsets = [0, 0], sizes = [10, 32], strides = [1, 1]} : vector<40x32xf32> to vector<10x32xf32>
    %108 = vector.extract_strided_slice %106 {offsets = [10, 0], sizes = [10, 32], strides = [1, 1]} : vector<40x32xf32> to vector<10x32xf32>
    %109 = arith.addf %107, %108 : vector<10x32xf32>
    %110 = vector.extract_strided_slice %106 {offsets = [20, 0], sizes = [10, 32], strides = [1, 1]} : vector<40x32xf32> to vector<10x32xf32>
    %111 = arith.addf %109, %110 : vector<10x32xf32>
    %112 = vector.extract_strided_slice %106 {offsets = [30, 0], sizes = [10, 32], strides = [1, 1]} : vector<40x32xf32> to vector<10x32xf32>
    %113 = arith.addf %111, %112 : vector<10x32xf32>
    %c0_42 = arith.constant 0 : index
    %c0_43 = arith.constant 0 : index
    %c384_44 = arith.constant 384 : index
    %114 = vector.load %arg2[%c0_42, %c0_43, %c384_44] : memref<2x40x768xf32, #tpu.memory_space<vmem>>, vector<1x32x32xf32>
    %115 = vector.shape_cast %114 : vector<1x32x32xf32> to vector<32x32xf32>
    %cst_45 = arith.constant dense<0.000000e+00> : vector<10x32xf32>
    %116 = tpu.matmul %113, %115, %cst_45 {dimension_numbers = #tpu.dot_dimension_numbers<[1], [0], [0], [1], [0, 0, 1, 1], [], []>} : vector<10x32xf32>, vector<32x32xf32>, vector<10x32xf32> -> vector<10x32xf32>
    %117 = vector.broadcast %70 : vector<1x32xf32> to vector<10x32xf32>
    %118 = arith.addf %116, %117 : vector<10x32xf32>
    %119 = arith.addf %118, %13 : vector<10x32xf32>
    %cst_46 = arith.constant dense<0.000000e+00> : vector<10xf32>
    %120 = vector.multi_reduction <add>, %119, %cst_46 [1] : vector<10x32xf32> to vector<10xf32>
    %121 = vector.shape_cast %120 : vector<10xf32> to vector<10x1xf32>
    %cst_47 = arith.constant 3.200000e+01 : f32
    %122 = vector.broadcast %cst_47 : f32 to vector<10x1xf32>
    %123 = arith.divf %121, %122 : vector<10x1xf32>
    %124 = vector.broadcast %123 : vector<10x1xf32> to vector<10x32xf32>
    %125 = arith.subf %119, %124 : vector<10x32xf32>
    %126 = arith.mulf %125, %125 : vector<10x32xf32>
    %cst_48 = arith.constant dense<0.000000e+00> : vector<10xf32>
    %127 = vector.multi_reduction <add>, %126, %cst_48 [1] : vector<10x32xf32> to vector<10xf32>
    %128 = vector.shape_cast %127 : vector<10xf32> to vector<10x1xf32>
    %cst_49 = arith.constant 3.200000e+01 : f32
    %129 = vector.broadcast %cst_49 : f32 to vector<10x1xf32>
    %130 = arith.divf %128, %129 : vector<10x1xf32>
    %131 = vector.broadcast %123 : vector<10x1xf32> to vector<10x32xf32>
    %132 = arith.subf %119, %131 : vector<10x32xf32>
    %cst_50 = arith.constant 9.99999974E-6 : f32
    %133 = vector.broadcast %cst_50 : f32 to vector<10x1xf32>
    %134 = arith.addf %130, %133 : vector<10x1xf32>
    %135 = math.rsqrt %134 : vector<10x1xf32>
    %136 = vector.broadcast %135 : vector<10x1xf32> to vector<10x32xf32>
    %137 = arith.mulf %132, %136 : vector<10x32xf32>
    %138 = vector.broadcast %72 : vector<1x32xf32> to vector<10x32xf32>
    %139 = arith.mulf %137, %138 : vector<10x32xf32>
    %140 = vector.broadcast %74 : vector<1x32xf32> to vector<10x32xf32>
    %141 = arith.addf %139, %140 : vector<10x32xf32>
    %c0_51 = arith.constant 0 : index
    %c0_52 = arith.constant 0 : index
    %c512_53 = arith.constant 512 : index
    %142 = vector.load %arg2[%c0_51, %c0_52, %c512_53] : memref<2x40x768xf32, #tpu.memory_space<vmem>>, vector<1x32x64xf32>
    %143 = vector.shape_cast %142 : vector<1x32x64xf32> to vector<32x64xf32>
    %cst_54 = arith.constant dense<0.000000e+00> : vector<10x64xf32>
    %144 = tpu.matmul %141, %143, %cst_54 {dimension_numbers = #tpu.dot_dimension_numbers<[1], [0], [0], [1], [0, 0, 1, 1], [], []>} : vector<10x32xf32>, vector<32x64xf32>, vector<10x64xf32> -> vector<10x64xf32>
    %145 = vector.broadcast %76 : vector<1x64xf32> to vector<10x64xf32>
    %146 = arith.addf %144, %145 : vector<10x64xf32>
    %cst_55 = arith.constant 0.000000e+00 : f32
    %147 = vector.broadcast %cst_55 : f32 to vector<10x64xf32>
    %148 = arith.maximumf %146, %147 : vector<10x64xf32>
    %c0_56 = arith.constant 0 : index
    %c0_57 = arith.constant 0 : index
    %c640_58 = arith.constant 640 : index
    %149 = vector.load %arg2[%c0_56, %c0_57, %c640_58] : memref<2x40x768xf32, #tpu.memory_space<vmem>>, vector<1x32x64xf32>
    %150 = vector.shape_cast %149 : vector<1x32x64xf32> to vector<32x64xf32>
    %cst_59 = arith.constant dense<0.000000e+00> : vector<10x32xf32>
    %151 = tpu.matmul %148, %150, %cst_59 {dimension_numbers = #tpu.dot_dimension_numbers<[1], [1], [0], [0], [0, 0, 1, 0], [], []>} : vector<10x64xf32>, vector<32x64xf32>, vector<10x32xf32> -> vector<10x32xf32>
    %152 = vector.broadcast %78 : vector<1x32xf32> to vector<10x32xf32>
    %153 = arith.addf %151, %152 : vector<10x32xf32>
    %154 = arith.addf %153, %141 : vector<10x32xf32>
    %cst_60 = arith.constant dense<0.000000e+00> : vector<10xf32>
    %155 = vector.multi_reduction <add>, %154, %cst_60 [1] : vector<10x32xf32> to vector<10xf32>
    %156 = vector.shape_cast %155 : vector<10xf32> to vector<10x1xf32>
    %cst_61 = arith.constant 3.200000e+01 : f32
    %157 = vector.broadcast %cst_61 : f32 to vector<10x1xf32>
    %158 = arith.divf %156, %157 : vector<10x1xf32>
    %159 = vector.broadcast %158 : vector<10x1xf32> to vector<10x32xf32>
    %160 = arith.subf %154, %159 : vector<10x32xf32>
    %161 = arith.mulf %160, %160 : vector<10x32xf32>
    %cst_62 = arith.constant dense<0.000000e+00> : vector<10xf32>
    %162 = vector.multi_reduction <add>, %161, %cst_62 [1] : vector<10x32xf32> to vector<10xf32>
    %163 = vector.shape_cast %162 : vector<10xf32> to vector<10x1xf32>
    %cst_63 = arith.constant 3.200000e+01 : f32
    %164 = vector.broadcast %cst_63 : f32 to vector<10x1xf32>
    %165 = arith.divf %163, %164 : vector<10x1xf32>
    %166 = vector.broadcast %158 : vector<10x1xf32> to vector<10x32xf32>
    %167 = arith.subf %154, %166 : vector<10x32xf32>
    %cst_64 = arith.constant 9.99999974E-6 : f32
    %168 = vector.broadcast %cst_64 : f32 to vector<10x1xf32>
    %169 = arith.addf %165, %168 : vector<10x1xf32>
    %170 = math.rsqrt %169 : vector<10x1xf32>
    %171 = vector.broadcast %170 : vector<10x1xf32> to vector<10x32xf32>
    %172 = arith.mulf %167, %171 : vector<10x32xf32>
    %173 = vector.broadcast %80 : vector<1x32xf32> to vector<10x32xf32>
    %174 = arith.mulf %172, %173 : vector<10x32xf32>
    %175 = vector.broadcast %82 : vector<1x32xf32> to vector<10x32xf32>
    %176 = arith.addf %174, %175 : vector<10x32xf32>
    %c1 = arith.constant 1 : index
    %c32_65 = arith.constant 32 : index
    %c0_66 = arith.constant 0 : index
    %177 = vector.load %arg2[%c1, %c32_65, %c0_66] : memref<2x40x768xf32, #tpu.memory_space<vmem>>, vector<1x1x384xf32>
    %178 = vector.shape_cast %177 : vector<1x1x384xf32> to vector<1x384xf32>
    %c1_67 = arith.constant 1 : index
    %c32_68 = arith.constant 32 : index
    %c384_69 = arith.constant 384 : index
    %179 = vector.load %arg2[%c1_67, %c32_68, %c384_69] : memref<2x40x768xf32, #tpu.memory_space<vmem>>, vector<1x1x32xf32>
    %180 = vector.shape_cast %179 : vector<1x1x32xf32> to vector<1x32xf32>
    %c1_70 = arith.constant 1 : index
    %c32_71 = arith.constant 32 : index
    %c512_72 = arith.constant 512 : index
    %181 = vector.load %arg2[%c1_70, %c32_71, %c512_72] : memref<2x40x768xf32, #tpu.memory_space<vmem>>, vector<1x1x32xf32>
    %182 = vector.shape_cast %181 : vector<1x1x32xf32> to vector<1x32xf32>
    %c1_73 = arith.constant 1 : index
    %c32_74 = arith.constant 32 : index
    %c640_75 = arith.constant 640 : index
    %183 = vector.load %arg2[%c1_73, %c32_74, %c640_75] : memref<2x40x768xf32, #tpu.memory_space<vmem>>, vector<1x1x32xf32>
    %184 = vector.shape_cast %183 : vector<1x1x32xf32> to vector<1x32xf32>
    %c1_76 = arith.constant 1 : index
    %c33_77 = arith.constant 33 : index
    %c0_78 = arith.constant 0 : index
    %185 = vector.load %arg2[%c1_76, %c33_77, %c0_78] : memref<2x40x768xf32, #tpu.memory_space<vmem>>, vector<1x1x64xf32>
    %186 = vector.shape_cast %185 : vector<1x1x64xf32> to vector<1x64xf32>
    %c1_79 = arith.constant 1 : index
    %c33_80 = arith.constant 33 : index
    %c128_81 = arith.constant 128 : index
    %187 = vector.load %arg2[%c1_79, %c33_80, %c128_81] : memref<2x40x768xf32, #tpu.memory_space<vmem>>, vector<1x1x32xf32>
    %188 = vector.shape_cast %187 : vector<1x1x32xf32> to vector<1x32xf32>
    %c1_82 = arith.constant 1 : index
    %c33_83 = arith.constant 33 : index
    %c256_84 = arith.constant 256 : index
    %189 = vector.load %arg2[%c1_82, %c33_83, %c256_84] : memref<2x40x768xf32, #tpu.memory_space<vmem>>, vector<1x1x32xf32>
    %190 = vector.shape_cast %189 : vector<1x1x32xf32> to vector<1x32xf32>
    %c1_85 = arith.constant 1 : index
    %c33_86 = arith.constant 33 : index
    %c384_87 = arith.constant 384 : index
    %191 = vector.load %arg2[%c1_85, %c33_86, %c384_87] : memref<2x40x768xf32, #tpu.memory_space<vmem>>, vector<1x1x32xf32>
    %192 = vector.shape_cast %191 : vector<1x1x32xf32> to vector<1x32xf32>
    %c1_88 = arith.constant 1 : index
    %c0_89 = arith.constant 0 : index
    %c0_90 = arith.constant 0 : index
    %193 = vector.load %arg2[%c1_88, %c0_89, %c0_90] : memref<2x40x768xf32, #tpu.memory_space<vmem>>, vector<1x32x384xf32>
    %194 = vector.shape_cast %193 : vector<1x32x384xf32> to vector<32x384xf32>
    %cst_91 = arith.constant dense<0.000000e+00> : vector<10x384xf32>
    %195 = tpu.matmul %176, %194, %cst_91 {dimension_numbers = #tpu.dot_dimension_numbers<[1], [0], [0], [1], [0, 0, 1, 1], [], []>} : vector<10x32xf32>, vector<32x384xf32>, vector<10x384xf32> -> vector<10x384xf32>
    %196 = vector.broadcast %178 : vector<1x384xf32> to vector<10x384xf32>
    %197 = arith.addf %195, %196 : vector<10x384xf32>
    %198 = vector.extract_strided_slice %197 {offsets = [0, 0], sizes = [10, 32], strides = [1, 1]} : vector<10x384xf32> to vector<10x32xf32>
    %199 = vector.extract_strided_slice %197 {offsets = [0, 128], sizes = [10, 32], strides = [1, 1]} : vector<10x384xf32> to vector<10x32xf32>
    %200 = vector.extract_strided_slice %197 {offsets = [0, 256], sizes = [10, 32], strides = [1, 1]} : vector<10x384xf32> to vector<10x32xf32>
    %201 = tpu.concatenate %198, %198, %198, %198 in 0 : vector<10x32xf32>, vector<10x32xf32>, vector<10x32xf32>, vector<10x32xf32> -> vector<40x32xf32>
    %202 = arith.mulf %201, %43 : vector<40x32xf32>
    %cst_92 = arith.constant dense<0.000000e+00> : vector<40x10xf32>
    %203 = tpu.matmul %202, %199, %cst_92 {dimension_numbers = #tpu.dot_dimension_numbers<[1], [1], [0], [0], [0, 0, 1, 0], [], []>} : vector<40x32xf32>, vector<10x32xf32>, vector<40x10xf32> -> vector<40x10xf32>
    %204 = arith.select %61, %66, %203 : vector<40x10xi1>, vector<40x10xf32>
    %cst_93 = arith.constant dense<0xFF800000> : vector<40xf32>
    %205 = vector.multi_reduction <maximumf>, %204, %cst_93 [1] : vector<40x10xf32> to vector<40xf32>
    %206 = vector.shape_cast %205 : vector<40xf32> to vector<40x1xf32>
    %207 = vector.broadcast %206 : vector<40x1xf32> to vector<40x10xf32>
    %208 = arith.subf %204, %207 : vector<40x10xf32>
    %209 = math.exp %208 : vector<40x10xf32>
    %cst_94 = arith.constant dense<0.000000e+00> : vector<40xf32>
    %210 = vector.multi_reduction <add>, %209, %cst_94 [1] : vector<40x10xf32> to vector<40xf32>
    %211 = vector.shape_cast %210 : vector<40xf32> to vector<40x1xf32>
    %212 = vector.broadcast %211 : vector<40x1xf32> to vector<40x10xf32>
    %213 = arith.divf %209, %212 : vector<40x10xf32>
    %c40 = arith.constant 40 : index
    %c0_95 = arith.constant 0 : index
    %214 = vector.load %arg4[%c40, %c0_95] : memref<80x10xf32, #tpu.memory_space<vmem>>, vector<40x10xf32>
    tpu.vector_store %arg4[%c40, %c0_95], %213 {strides = array<i32>} : memref<80x10xf32, #tpu.memory_space<vmem>>, vector<40x10xf32>,
    %cst_96 = arith.constant dense<0.000000e+00> : vector<40x32xf32>
    %215 = tpu.matmul %213, %200, %cst_96 {dimension_numbers = #tpu.dot_dimension_numbers<[1], [0], [0], [1], [0, 0, 1, 1], [], []>} : vector<40x10xf32>, vector<10x32xf32>, vector<40x32xf32> -> vector<40x32xf32>
    %216 = arith.mulf %215, %43 : vector<40x32xf32>
    %217 = vector.extract_strided_slice %216 {offsets = [0, 0], sizes = [10, 32], strides = [1, 1]} : vector<40x32xf32> to vector<10x32xf32>
    %218 = vector.extract_strided_slice %216 {offsets = [10, 0], sizes = [10, 32], strides = [1, 1]} : vector<40x32xf32> to vector<10x32xf32>
    %219 = arith.addf %217, %218 : vector<10x32xf32>
    %220 = vector.extract_strided_slice %216 {offsets = [20, 0], sizes = [10, 32], strides = [1, 1]} : vector<40x32xf32> to vector<10x32xf32>
    %221 = arith.addf %219, %220 : vector<10x32xf32>
    %222 = vector.extract_strided_slice %216 {offsets = [30, 0], sizes = [10, 32], strides = [1, 1]} : vector<40x32xf32> to vector<10x32xf32>
    %223 = arith.addf %221, %222 : vector<10x32xf32>
    %c1_97 = arith.constant 1 : index
    %c0_98 = arith.constant 0 : index
    %c384_99 = arith.constant 384 : index
    %224 = vector.load %arg2[%c1_97, %c0_98, %c384_99] : memref<2x40x768xf32, #tpu.memory_space<vmem>>, vector<1x32x32xf32>
    %225 = vector.shape_cast %224 : vector<1x32x32xf32> to vector<32x32xf32>
    %cst_100 = arith.constant dense<0.000000e+00> : vector<10x32xf32>
    %226 = tpu.matmul %223, %225, %cst_100 {dimension_numbers = #tpu.dot_dimension_numbers<[1], [0], [0], [1], [0, 0, 1, 1], [], []>} : vector<10x32xf32>, vector<32x32xf32>, vector<10x32xf32> -> vector<10x32xf32>
    %227 = vector.broadcast %180 : vector<1x32xf32> to vector<10x32xf32>
    %228 = arith.addf %226, %227 : vector<10x32xf32>
    %229 = arith.addf %228, %176 : vector<10x32xf32>
    %cst_101 = arith.constant dense<0.000000e+00> : vector<10xf32>
    %230 = vector.multi_reduction <add>, %229, %cst_101 [1] : vector<10x32xf32> to vector<10xf32>
    %231 = vector.shape_cast %230 : vector<10xf32> to vector<10x1xf32>
    %cst_102 = arith.constant 3.200000e+01 : f32
    %232 = vector.broadcast %cst_102 : f32 to vector<10x1xf32>
    %233 = arith.divf %231, %232 : vector<10x1xf32>
    %234 = vector.broadcast %233 : vector<10x1xf32> to vector<10x32xf32>
    %235 = arith.subf %229, %234 : vector<10x32xf32>
    %236 = arith.mulf %235, %235 : vector<10x32xf32>
    %cst_103 = arith.constant dense<0.000000e+00> : vector<10xf32>
    %237 = vector.multi_reduction <add>, %236, %cst_103 [1] : vector<10x32xf32> to vector<10xf32>
    %238 = vector.shape_cast %237 : vector<10xf32> to vector<10x1xf32>
    %cst_104 = arith.constant 3.200000e+01 : f32
    %239 = vector.broadcast %cst_104 : f32 to vector<10x1xf32>
    %240 = arith.divf %238, %239 : vector<10x1xf32>
    %241 = vector.broadcast %233 : vector<10x1xf32> to vector<10x32xf32>
    %242 = arith.subf %229, %241 : vector<10x32xf32>
    %cst_105 = arith.constant 9.99999974E-6 : f32
    %243 = vector.broadcast %cst_105 : f32 to vector<10x1xf32>
    %244 = arith.addf %240, %243 : vector<10x1xf32>
    %245 = math.rsqrt %244 : vector<10x1xf32>
    %246 = vector.broadcast %245 : vector<10x1xf32> to vector<10x32xf32>
    %247 = arith.mulf %242, %246 : vector<10x32xf32>
    %248 = vector.broadcast %182 : vector<1x32xf32> to vector<10x32xf32>
    %249 = arith.mulf %247, %248 : vector<10x32xf32>
    %250 = vector.broadcast %184 : vector<1x32xf32> to vector<10x32xf32>
    %251 = arith.addf %249, %250 : vector<10x32xf32>
    %c1_106 = arith.constant 1 : index
    %c0_107 = arith.constant 0 : index
    %c512_108 = arith.constant 512 : index
    %252 = vector.load %arg2[%c1_106, %c0_107, %c512_108] : memref<2x40x768xf32, #tpu.memory_space<vmem>>, vector<1x32x64xf32>
    %253 = vector.shape_cast %252 : vector<1x32x64xf32> to vector<32x64xf32>
    %cst_109 = arith.constant dense<0.000000e+00> : vector<10x64xf32>
    %254 = tpu.matmul %251, %253, %cst_109 {dimension_numbers = #tpu.dot_dimension_numbers<[1], [0], [0], [1], [0, 0, 1, 1], [], []>} : vector<10x32xf32>, vector<32x64xf32>, vector<10x64xf32> -> vector<10x64xf32>
    %255 = vector.broadcast %186 : vector<1x64xf32> to vector<10x64xf32>
    %256 = arith.addf %254, %255 : vector<10x64xf32>
    %cst_110 = arith.constant 0.000000e+00 : f32
    %257 = vector.broadcast %cst_110 : f32 to vector<10x64xf32>
    %258 = arith.maximumf %256, %257 : vector<10x64xf32>
    %c1_111 = arith.constant 1 : index
    %c0_112 = arith.constant 0 : index
    %c640_113 = arith.constant 640 : index
    %259 = vector.load %arg2[%c1_111, %c0_112, %c640_113] : memref<2x40x768xf32, #tpu.memory_space<vmem>>, vector<1x32x64xf32>
    %260 = vector.shape_cast %259 : vector<1x32x64xf32> to vector<32x64xf32>
    %cst_114 = arith.constant dense<0.000000e+00> : vector<10x32xf32>
    %261 = tpu.matmul %258, %260, %cst_114 {dimension_numbers = #tpu.dot_dimension_numbers<[1], [1], [0], [0], [0, 0, 1, 0], [], []>} : vector<10x64xf32>, vector<32x64xf32>, vector<10x32xf32> -> vector<10x32xf32>
    %262 = vector.broadcast %188 : vector<1x32xf32> to vector<10x32xf32>
    %263 = arith.addf %261, %262 : vector<10x32xf32>
    %264 = arith.addf %263, %251 : vector<10x32xf32>
    %cst_115 = arith.constant dense<0.000000e+00> : vector<10xf32>
    %265 = vector.multi_reduction <add>, %264, %cst_115 [1] : vector<10x32xf32> to vector<10xf32>
    %266 = vector.shape_cast %265 : vector<10xf32> to vector<10x1xf32>
    %cst_116 = arith.constant 3.200000e+01 : f32
    %267 = vector.broadcast %cst_116 : f32 to vector<10x1xf32>
    %268 = arith.divf %266, %267 : vector<10x1xf32>
    %269 = vector.broadcast %268 : vector<10x1xf32> to vector<10x32xf32>
    %270 = arith.subf %264, %269 : vector<10x32xf32>
    %271 = arith.mulf %270, %270 : vector<10x32xf32>
    %cst_117 = arith.constant dense<0.000000e+00> : vector<10xf32>
    %272 = vector.multi_reduction <add>, %271, %cst_117 [1] : vector<10x32xf32> to vector<10xf32>
    %273 = vector.shape_cast %272 : vector<10xf32> to vector<10x1xf32>
    %cst_118 = arith.constant 3.200000e+01 : f32
    %274 = vector.broadcast %cst_118 : f32 to vector<10x1xf32>
    %275 = arith.divf %273, %274 : vector<10x1xf32>
    %276 = vector.broadcast %268 : vector<10x1xf32> to vector<10x32xf32>
    %277 = arith.subf %264, %276 : vector<10x32xf32>
    %cst_119 = arith.constant 9.99999974E-6 : f32
    %278 = vector.broadcast %cst_119 : f32 to vector<10x1xf32>
    %279 = arith.addf %275, %278 : vector<10x1xf32>
    %280 = math.rsqrt %279 : vector<10x1xf32>
    %281 = vector.broadcast %280 : vector<10x1xf32> to vector<10x32xf32>
    %282 = arith.mulf %277, %281 : vector<10x32xf32>
    %283 = vector.broadcast %190 : vector<1x32xf32> to vector<10x32xf32>
    %284 = arith.mulf %282, %283 : vector<10x32xf32>
    %285 = vector.broadcast %192 : vector<1x32xf32> to vector<10x32xf32>
    %286 = arith.addf %284, %285 : vector<10x32xf32>
    %cst_120 = arith.constant 0.000000e+00 : f32
    %287 = vector.broadcast %cst_120 : f32 to vector<6x32xf32>
    %288 = tpu.concatenate %286, %287 in 0 : vector<10x32xf32>, vector<6x32xf32> -> vector<16x32xf32>
    %c0_121 = arith.constant 0 : index
    %c0_122 = arith.constant 0 : index
    %289 = vector.load %arg3[%c0_121, %c0_122] : memref<16x32xf32, #tpu.memory_space<vmem>>, vector<16x32xf32>
    tpu.vector_store %arg3[%c0_121, %c0_122], %288 {strides = array<i32>} : memref<16x32xf32, #tpu.memory_space<vmem>>, vector<16x32xf32>,
    return
  }
}

</mosaic_0001>

<llo_original>
// kernel: transformer_encoder.1
$region0: #{transformer_encoder.1}
  #allocation0 [shape = 'u32[]', space=smem, size = 0x4, offset = 0x4, fixed_abs, tag = 'smem constant byte address 0x4 - core index']
  #allocation1 [shape = 'u32[144,128]{1,0:T(1,128)}', space=vmem, size = 0x12000, scoped, tag = 'internal scratch']
  %s0 = inlined_call_operand.vmem [shape: s32[16,16], index: 0, kind: input, shape index: {}]
  %s1 = inlined_call_operand.vmem [shape: f32[16,32], index: 1, kind: input, shape index: {}]
  %s2 = inlined_call_operand.hbm [shape: f32[2,40,768], index: 2, kind: input, shape index: {}]
  %s3 = inlined_call_operand.vmem [shape: f32[16,32], index: 3, kind: output, shape index: {0}]
  %s4 = inlined_call_operand.vmem [shape: f32[80,10], index: 4, kind: output, shape index: {1}]
  %5 = xla_tuple %s3, %s4
  %s6 = sld [smem:[#allocation0]]
  $region34: #{transformer_encoder.1} parent=0
    _
  %s8 = ssub.s32 1, %s6
  %s9 = scalar_select 0, %s8, %s6
  $region1: #{transformer_encoder.1} parent=0
    #allocation2 [shape = 'u8[245760]{0}', space=vmem, size = 0x3c000, scoped, tag = 'input window, operand 2, single buffered']
    #allocation3 [shape = 's32[1]{0}', space=sflag, size = 0x4, scoped, tag = 'scoped memory for transformer_encoder.1']
    %10 = vsyncpa [#allocation3], 0
    // Predicated region
    $region2: #{transformer_encoder.1} parent=1 // pred_check
      _
    $region3: #{transformer_encoder.1} parent=1 // pred_check_branch
      %12 = sbr.rel (0) target = $region5
    $region4: #{transformer_encoder.1} parent=1 // pred_region
      _
    $region5: #{transformer_encoder.1} parent=1 // pred_fallthru
      _
    // Predicated region
    $region6: #{transformer_encoder.1} parent=1 // pred_check
      _
    $region7: #{transformer_encoder.1} parent=1 // pred_check_branch
      %14 = sbr.rel (0) target = $region9
    $region8: #{transformer_encoder.1} parent=1 // pred_region
      _
    $region9: #{transformer_encoder.1} parent=1 // pred_fallthru
      _
    // Predicated region
    $region10: #{transformer_encoder.1} parent=1 // pred_check
      _
    $region11: #{transformer_encoder.1} parent=1 // pred_check_branch
      %16 = sbr.rel (0) target = $region13
    $region12: #{transformer_encoder.1} parent=1 // pred_region
      %s18 = ssub.s32 7680, 7680
      %19 = vsyncadd [#allocation3], %s18
      %s20 = sshll.u32 [#allocation2], 4
      %s21 = int_to_ptr.vmem [resolvable:$true] %s20
      %26 = dma.hbm_to_vmem [thread:$0]  %s2, 7680, %s21, [#allocation3], 768, 768, 48
    $region13: #{transformer_encoder.1} parent=1 // pred_fallthru
      _
    // Predicated region
    $region14: #{transformer_encoder.1} parent=1 // pred_check
      _
    $region15: #{transformer_encoder.1} parent=1 // pred_check_branch
      %28 = sbr.rel (0) target = $region17
    $region16: #{transformer_encoder.1} parent=1 // pred_region
      %29 = dma.done [#allocation3], 7680
    $region17: #{transformer_encoder.1} parent=1 // pred_fallthru
      _
    %v30 = vld [vmem:[%s0] sm:$0x1]
    %v31 = vld [vmem:[%s0] sm:$0xff]
    %v32 = vld [vmem:[%s0 + $0x8] sm:$0x3]
    %v33 = vlaneseq
    %v34 = vand.u32 %v33, 127
    %v35 = vlaneseq
    %v36 = vshrl.u32 %v35, 7
    %v37 = vadd.s32 %v36, 8
    %38 = vset.pattern.permute.xlu0 0
    %39 = vperm.xlu0 %38, %v31
    %v40 = vpop.permute.xlu0 %39
    %41 = vset.pattern.permute.xlu0 0
    %42 = vperm.xlu0 %41, %v32
    %v43 = vpop.permute.xlu0 %42
    %vm44 = vcmp.eq.s32.totalorder %v34, %v40
    %vm45 = vcmp.eq.s32.totalorder %v34, %v43
    %v46 = vadd.s32 %v36, 5
    %v47 = vadd.s32 %v37, 5
    %vm48 = vcmp.eq.s32.totalorder %v34, %v46
    %vm49 = vcmp.eq.s32.totalorder %v34, %v47
    %vm50 = vmor %vm44, %vm48
    %vm51 = vmor %vm45, %vm49
    %v52 = vsel %vm50, 1, 0
    %v53 = vsel %vm51, 1, 0
    %v54 = vcvt.s32.f32 %v52
    %v55 = vcvt.s32.f32 %v53
    %v56 = vld [vmem:[%s1] sm:$0xff]
    %v57 = vld [vmem:[%s1 + $0x8] sm:$0xff]
    %vm58 = vcmask 130048
    %v60 = vsel %vm58, %v54, 0
    %v63 = vsel %vm58, %v55, 0
    %65 = vmatprep.subr.mxu0 0.0
    %66 = vmatpush1.msra.mxu0 0.0
    %67 = vmatprep.subr.mxu0 0.0
    %68 = vmatpush1.msra.mxu0 0.0
    %69 = vmatprep.subr.mxu0 0.0
    %70 = vmatpush1.msra.mxu0 0.0
    %71 = vmatprep.subr.mxu0 0.0
    %72 = vmatpush1.msra.mxu0 0.0
    %73 = vmatprep.subr.mxu0 0.0
    %74 = vmatpush1.msra.mxu0 0.0
    %75 = vmatprep.subr.mxu0 0.0
    %76 = vmatpush1.msra.mxu0 0.0
    %77 = vmatprep.subr.mxu0 0.0
    %78 = vmatpush1.msra.mxu0 0.0
    %79 = vmatprep.subr.mxu0 0.0
    %80 = vmatpush1.msra.mxu0 0.0
    %81 = vmatprep.subr.mxu0 0.0
    %82 = vmatpush1.msra.mxu0 0.0
    %83 = vmatprep.subr.mxu0 0.0
    %84 = vmatpush1.msra.mxu0 0.0
    %85 = vmatprep.subr.mxu0 0.0
    %86 = vmatpush1.msra.mxu0 0.0
    %87 = vmatprep.subr.mxu0 0.0
    %88 = vmatpush1.msra.mxu0 0.0
    %89 = vmatprep.subr.mxu0 0.0
    %90 = vmatpush1.msra.mxu0 0.0
    %91 = vmatprep.subr.mxu0 0.0
    %92 = vmatpush1.msra.mxu0 0.0
    %93 = vmatprep.subr.mxu0 0.0
    %94 = vmatpush1.msra.mxu0 %v57
    %95 = vmatprep.subr.mxu0 0.0
    %96 = vmatpush1.msra.mxu0 %v56
    %97 = vmatprep.subr.mxu0 0.0
    %98 = vmatpush2.msra.mxu0 0.0
    %99 = vmatprep.subr.mxu0 0.0
    %100 = vmatpush2.msra.mxu0 0.0
    %101 = vmatprep.subr.mxu0 0.0
    %102 = vmatpush2.msra.mxu0 0.0
    %103 = vmatprep.subr.mxu0 0.0
    %104 = vmatpush2.msra.mxu0 0.0
    %105 = vmatprep.subr.mxu0 0.0
    %106 = vmatpush2.msra.mxu0 0.0
    %107 = vmatprep.subr.mxu0 0.0
    %108 = vmatpush2.msra.mxu0 0.0
    %109 = vmatprep.subr.mxu0 0.0
    %110 = vmatpush2.msra.mxu0 0.0
    %111 = vmatprep.subr.mxu0 0.0
    %112 = vmatpush2.msra.mxu0 0.0
    %113 = vmatprep.subr.mxu0 0.0
    %114 = vmatpush2.msra.mxu0 0.0
    %115 = vmatprep.subr.mxu0 0.0
    %116 = vmatpush2.msra.mxu0 0.0
    %117 = vmatprep.subr.mxu0 0.0
    %118 = vmatpush2.msra.mxu0 0.0
    %119 = vmatprep.subr.mxu0 0.0
    %120 = vmatpush2.msra.mxu0 0.0
    %121 = vmatprep.subr.mxu0 0.0
    %122 = vmatpush2.msra.mxu0 0.0
    %123 = vmatprep.subr.mxu0 0.0
    %124 = vmatpush2.msra.mxu0 0.0
    %125 = vmatprep.subr.mxu0 0.0
    %126 = vmatpush2.msra.mxu0 0.0
    %127 = vmatprep.subr.mxu0 0.0
    %128 = vmatpush2.msra.mxu0 0.0
    %129 = vmatprep.mubr.f32.mxu0 0.0
    %130 = vmatmul.mubr.f32.gmra.mxu0 %v60
    %v131 = vpop.f32.mrf.mxu0
    %v132 = vadd.f32 0.0, %v131
    %v133 = vpop.f32.mrf.mxu0
    %134 = vmatprep.mubr.f32.mxu0 0.0
    %135 = vmatmul.mubr.f32.gmra.mxu0 %v63
    %v136 = vpop.f32.mrf.mxu0
    %v137 = vadd.f32 0.0, %v136
    %v138 = vpop.f32.mrf.mxu0
    %139 = vdwg.mxu0
    %vm140 = vcmp.ge.s32.totalorder %v34, 0
    %vm141 = vcmp.lt.s32.totalorder %v34, 8
    %vm142 = vmand %vm140, %vm141
    %v143 = vsel %vm142, 1, 0
    %v144 = vcvt.s32.f32 %v143
    %vm145 = vcmp.ge.s32.totalorder %v34, 8
    %vm146 = vcmp.lt.s32.totalorder %v34, 16
    %vm147 = vmand %vm145, %vm146
    %v148 = vsel %vm147, 1, 0
    %v149 = vcvt.s32.f32 %v148
    %vm150 = vcmp.ge.s32.totalorder %v34, 16
    %vm151 = vcmp.lt.s32.totalorder %v34, 24
    %vm152 = vmand %vm150, %vm151
    %v153 = vsel %vm152, 1, 0
    %v154 = vcvt.s32.f32 %v153
    %vm155 = vcmp.ge.s32.totalorder %v34, 24
    %vm156 = vcmp.lt.s32.totalorder %v34, 32
    %vm157 = vmand %vm155, %vm156
    %v158 = vsel %vm157, 1, 0
    %v159 = vcvt.s32.f32 %v158
    %vm160 = vcmask 1041408
    %v161 = vsel %vm160, %v144, %v149
    %vm162 = vcmask 1043456
    %v163 = vsel %vm162, %v149, %v154
    %vm164 = vcmask 1045504
    %v165 = vsel %vm164, %v154, %v159
    %vm166 = vcmp.ge.s32.totalorder %v36, 5
    %vm167 = vcmp.ge.s32.totalorder %v37, 5
    %vm168 = vcmp.ge.s32.totalorder %v34, 5
    %vm169 = vmxor %vm166, %vm168
    %vm170 = vmxor %vm167, %vm168
    %v171 = vsel %vm169, 1, 0
    %v172 = vsel %vm170, 1, 0
    %v173 = vcvt.s32.f32 %v171
    %v174 = vcvt.s32.f32 %v172
    %v177 = vrot.slane %v173, 6
    %v178 = vrot.slane %v174, 6
    %v179 = vsel %vm160, %v177, %v178
    %v182 = vrot.slane %v173, 4
    %v183 = vrot.slane %v174, 4
    %v184 = vsel %vm162, %v182, %v183
    %v187 = vrot.slane %v173, 2
    %v188 = vrot.slane %v174, 2
    %v189 = vsel %vm164, %v187, %v188
    %v192 = vsel %vm160, %v174, %v177
    %v193 = vsel %vm162, %v179, %v182
    %v194 = vsel %vm164, %v184, %v187
    %vm195 = vcmp.eq.s32.totalorder %v30, 0
    %v196 = vsel %vm195, 1, 0
    %v197 = vcvt.s32.f32 %v196
    %v198 = vlaneseq
    %v199 = vshrl.u32 %v198, 7
    %v200 = vsub.s32 0, %v199
    %v201 = vrot.slane %v197, %v200
    %v202 = vadd.f32 %v173, %v201
    %v203 = vadd.f32 %v192, %v201
    %v204 = vadd.f32 %v193, %v201
    %v205 = vadd.f32 %v194, %v201
    %v206 = vadd.f32 %v189, %v201
    %vm207 = vcmp.gt.f32.partialorder %v202, 0.0
    %vm208 = vcmp.gt.f32.partialorder %v203, 0.0
    %vm209 = vcmp.gt.f32.partialorder %v204, 0.0
    %vm210 = vcmp.gt.f32.partialorder %v205, 0.0
    %vm211 = vcmp.gt.f32.partialorder %v206, 0.0
    %vm212 = vcmp.gt.f32.partialorder %v173, 0.0
    %vm213 = vcmp.gt.f32.partialorder %v192, 0.0
    %vm214 = vcmp.gt.f32.partialorder %v193, 0.0
    %vm215 = vcmp.gt.f32.partialorder %v194, 0.0
    %vm216 = vcmp.gt.f32.partialorder %v189, 0.0
    %v217 = vsel %vm212, -2e+09, -1e+09
    %v218 = vsel %vm213, -2e+09, -1e+09
    %v219 = vsel %vm214, -2e+09, -1e+09
    %v220 = vsel %vm215, -2e+09, -1e+09
    %v221 = vsel %vm216, -2e+09, -1e+09
    %s222 = scalar_lea.vmem [#allocation2], 192
    %v223 = vld [vmem:[%s222] ss:$8 sm:$0x7]
    %v224 = vld [vmem:[#allocation2 + $0xd8] ss:$0 sm:$0xff]
    %v225 = vld [vmem:[#allocation2 + $0xe0] ss:$0 sm:$0xff]
    %v226 = vld [vmem:[#allocation2 + $0xe8] ss:$0 sm:$0xff]
    %v227 = vld [vmem:[#allocation2 + $0xc1] ss:$0 sm:$0xff]
    %v228 = vld [vmem:[#allocation2 + $0xc9] ss:$0 sm:$0xff]
    %v229 = vld [vmem:[#allocation2 + $0xd1] ss:$0 sm:$0xff]
    %v230 = vld [vmem:[#allocation2 + $0xd9] ss:$0 sm:$0xff]
    %v231 = vld [vmem:[#allocation2] sm:$0xff]
    %v232 = vld [vmem:[#allocation2 + $0x8] sm:$0xff]
    %v233 = vld [vmem:[#allocation2 + $0x10] sm:$0xff]
    %v234 = vld [vmem:[#allocation2 + $0x30] sm:$0xff]
    %v235 = vld [vmem:[#allocation2 + $0x38] sm:$0xff]
    %v236 = vld [vmem:[#allocation2 + $0x40] sm:$0xff]
    %v237 = vld [vmem:[#allocation2 + $0x60] sm:$0xff]
    %v238 = vld [vmem:[#allocation2 + $0x68] sm:$0xff]
    %v239 = vld [vmem:[#allocation2 + $0x70] sm:$0xff]
    %v240 = vld [vmem:[#allocation2 + $0x90] sm:$0xff]
    %v241 = vld [vmem:[#allocation2 + $0x98] sm:$0xff]
    %v242 = vld [vmem:[#allocation2 + $0xa0] sm:$0xff]
    %v244 = vlaneseq
    %v245 = vshrl.u32 %v244, 7
    %v246 = vsub.s32 0, %v245
    %v247 = vrot.slane %v223, %v246
    %v248 = vlaneseq
    %v249 = vshrl.u32 %v248, 7
    %v250 = vsub.s32 1, %v249
    %v251 = vrot.slane %v223, %v250
    %v252 = vlaneseq
    %v253 = vshrl.u32 %v252, 7
    %v254 = vsub.s32 2, %v253
    %v255 = vrot.slane %v223, %v254
    %vm259 = vcmask 261120
    %v261 = vsel %vm259, %v132, 0
    %v264 = vsel %vm259, %v137, 0
    %266 = vmatprep.subr.mxu0 0.0
    %267 = vmatpush1.msra.mxu0 0.0
    %268 = vmatprep.subr.mxu0 0.0
    %269 = vmatpush1.msra.mxu0 0.0
    %270 = vmatprep.subr.mxu0 0.0
    %271 = vmatpush1.msra.mxu0 0.0
    %272 = vmatprep.subr.mxu0 0.0
    %273 = vmatpush1.msra.mxu0 0.0
    %274 = vmatprep.subr.mxu0 0.0
    %275 = vmatpush1.msra.mxu0 0.0
    %276 = vmatprep.subr.mxu0 0.0
    %277 = vmatpush1.msra.mxu0 0.0
    %278 = vmatprep.subr.mxu0 0.0
    %279 = vmatpush1.msra.mxu0 0.0
    %280 = vmatprep.subr.mxu0 0.0
    %281 = vmatpush1.msra.mxu0 0.0
    %282 = vmatprep.subr.mxu0 0.0
    %283 = vmatpush1.msra.mxu0 0.0
    %284 = vmatprep.subr.mxu0 0.0
    %285 = vmatpush1.msra.mxu0 0.0
    %286 = vmatprep.subr.mxu0 0.0
    %287 = vmatpush1.msra.mxu0 0.0
    %288 = vmatprep.subr.mxu0 0.0
    %289 = vmatpush1.msra.mxu0 0.0
    %290 = vmatprep.subr.mxu0 %v241
    %291 = vmatpush1.msra.mxu0 %v240
    %292 = vmatprep.subr.mxu0 %v238
    %293 = vmatpush1.msra.mxu0 %v237
    %294 = vmatprep.subr.mxu0 %v235
    %295 = vmatpush1.msra.mxu0 %v234
    %296 = vmatprep.subr.mxu0 %v232
    %297 = vmatpush1.msra.mxu0 %v231
    %298 = vmatprep.subr.mxu0 0.0
    %299 = vmatpush2.msra.mxu0 0.0
    %300 = vmatprep.subr.mxu0 0.0
    %301 = vmatpush2.msra.mxu0 0.0
    %302 = vmatprep.subr.mxu0 0.0
    %303 = vmatpush2.msra.mxu0 0.0
    %304 = vmatprep.subr.mxu0 0.0
    %305 = vmatpush2.msra.mxu0 0.0
    %306 = vmatprep.subr.mxu0 0.0
    %307 = vmatpush2.msra.mxu0 0.0
    %308 = vmatprep.subr.mxu0 0.0
    %309 = vmatpush2.msra.mxu0 0.0
    %310 = vmatprep.subr.mxu0 0.0
    %311 = vmatpush2.msra.mxu0 0.0
    %312 = vmatprep.subr.mxu0 0.0
    %313 = vmatpush2.msra.mxu0 0.0
    %314 = vmatprep.subr.mxu0 0.0
    %315 = vmatpush2.msra.mxu0 0.0
    %316 = vmatprep.subr.mxu0 0.0
    %317 = vmatpush2.msra.mxu0 0.0
    %318 = vmatprep.subr.mxu0 0.0
    %319 = vmatpush2.msra.mxu0 0.0
    %320 = vmatprep.subr.mxu0 0.0
    %321 = vmatpush2.msra.mxu0 0.0
    %322 = vmatprep.subr.mxu0 0.0
    %323 = vmatpush2.msra.mxu0 0.0
    %324 = vmatprep.subr.mxu0 0.0
    %325 = vmatpush2.msra.mxu0 0.0
    %326 = vmatprep.subr.mxu0 0.0
    %327 = vmatpush2.msra.mxu0 0.0
    %328 = vmatprep.subr.mxu0 0.0
    %329 = vmatpush2.msra.mxu0 0.0
    %330 = vmatprep.mubr.f32.mxu0 0.0
    %331 = vmatmul.mubr.f32.gmra.mxu0 %v261
    %v332 = vpop.f32.mrf.mxu0
    %v333 = vadd.f32 %v247, %v332
    %v334 = vpop.f32.mrf.mxu0
    %v335 = vadd.f32 %v251, %v334
    %336 = vmatprep.mubr.f32.mxu0 0.0
    %337 = vmatmul.mubr.f32.gmra.mxu0 %v264
    %v338 = vpop.f32.mrf.mxu0
    %v339 = vadd.f32 %v247, %v338
    %v340 = vpop.f32.mrf.mxu0
    %v341 = vadd.f32 %v251, %v340
    %342 = vdwg.mxu0
    %343 = vmatprep.subr.mxu0 0.0
    %344 = vmatpush1.msra.mxu0 0.0
    %345 = vmatprep.subr.mxu0 0.0
    %346 = vmatpush1.msra.mxu0 0.0
    %347 = vmatprep.subr.mxu0 0.0
    %348 = vmatpush1.msra.mxu0 0.0
    %349 = vmatprep.subr.mxu0 0.0
    %350 = vmatpush1.msra.mxu0 0.0
    %351 = vmatprep.subr.mxu0 0.0
    %352 = vmatpush1.msra.mxu0 0.0
    %353 = vmatprep.subr.mxu0 0.0
    %354 = vmatpush1.msra.mxu0 0.0
    %355 = vmatprep.subr.mxu0 0.0
    %356 = vmatpush1.msra.mxu0 0.0
    %357 = vmatprep.subr.mxu0 0.0
    %358 = vmatpush1.msra.mxu0 0.0
    %359 = vmatprep.subr.mxu0 0.0
    %360 = vmatpush1.msra.mxu0 0.0
    %361 = vmatprep.subr.mxu0 0.0
    %362 = vmatpush1.msra.mxu0 0.0
    %363 = vmatprep.subr.mxu0 0.0
    %364 = vmatpush1.msra.mxu0 0.0
    %365 = vmatprep.subr.mxu0 0.0
    %366 = vmatpush1.msra.mxu0 0.0
    %367 = vmatprep.subr.mxu0 0.0
    %368 = vmatpush1.msra.mxu0 %v242
    %369 = vmatprep.subr.mxu0 0.0
    %370 = vmatpush1.msra.mxu0 %v239
    %371 = vmatprep.subr.mxu0 0.0
    %372 = vmatpush1.msra.mxu0 %v236
    %373 = vmatprep.subr.mxu0 0.0
    %374 = vmatpush1.msra.mxu0 %v233
    %375 = vmatprep.subr.mxu0 0.0
    %376 = vmatpush2.msra.mxu0 0.0
    %377 = vmatprep.subr.mxu0 0.0
    %378 = vmatpush2.msra.mxu0 0.0
    %379 = vmatprep.subr.mxu0 0.0
    %380 = vmatpush2.msra.mxu0 0.0
    %381 = vmatprep.subr.mxu0 0.0
    %382 = vmatpush2.msra.mxu0 0.0
    %383 = vmatprep.subr.mxu0 0.0
    %384 = vmatpush2.msra.mxu0 0.0
    %385 = vmatprep.subr.mxu0 0.0
    %386 = vmatpush2.msra.mxu0 0.0
    %387 = vmatprep.subr.mxu0 0.0
    %388 = vmatpush2.msra.mxu0 0.0
    %389 = vmatprep.subr.mxu0 0.0
    %390 = vmatpush2.msra.mxu0 0.0
    %391 = vmatprep.subr.mxu0 0.0
    %392 = vmatpush2.msra.mxu0 0.0
    %393 = vmatprep.subr.mxu0 0.0
    %394 = vmatpush2.msra.mxu0 0.0
    %395 = vmatprep.subr.mxu0 0.0
    %396 = vmatpush2.msra.mxu0 0.0
    %397 = vmatprep.subr.mxu0 0.0
    %398 = vmatpush2.msra.mxu0 0.0
    %399 = vmatprep.subr.mxu0 0.0
    %400 = vmatpush2.msra.mxu0 0.0
    %401 = vmatprep.subr.mxu0 0.0
    %402 = vmatpush2.msra.mxu0 0.0
    %403 = vmatprep.subr.mxu0 0.0
    %404 = vmatpush2.msra.mxu0 0.0
    %405 = vmatprep.subr.mxu0 0.0
    %406 = vmatpush2.msra.mxu0 0.0
    %407 = vmatprep.mubr.f32.mxu0 0.0
    %408 = vmatmul.mubr.f32.gmra.mxu0 %v261
    %v409 = vpop.f32.mrf.mxu0
    %v410 = vadd.f32 %v255, %v409
    %v411 = vpop.f32.mrf.mxu0
    %412 = vmatprep.mubr.f32.mxu0 0.0
    %413 = vmatmul.mubr.f32.gmra.mxu0 %v264
    %v414 = vpop.f32.mrf.mxu0
    %v415 = vadd.f32 %v255, %v414
    %v416 = vpop.f32.mrf.mxu0
    %417 = vdwg.mxu0
    %v420 = vrot.slane %v333, 6
    %v421 = vrot.slane %v339, 6
    %v422 = vsel %vm160, %v420, %v421
    %v425 = vrot.slane %v333, 4
    %v426 = vrot.slane %v339, 4
    %v427 = vsel %vm162, %v425, %v426
    %v430 = vrot.slane %v333, 2
    %v431 = vrot.slane %v339, 2
    %v432 = vsel %vm164, %v430, %v431
    %v435 = vsel %vm160, %v339, %v420
    %v436 = vsel %vm162, %v422, %v425
    %v437 = vsel %vm164, %v427, %v430
    %v438 = vmul.f32 %v333, %v144
    %v439 = vmul.f32 %v435, %v161
    %v440 = vmul.f32 %v436, %v163
    %v441 = vmul.f32 %v437, %v165
    %v442 = vmul.f32 %v432, %v159
    %v444 = vsel %vm259, %v438, 0
    %v447 = vsel %vm259, %v439, 0
    %v450 = vsel %vm259, %v440, 0
    %v453 = vsel %vm259, %v441, 0
    %v456 = vsel %vm259, %v442, 0
    %v459 = vsel %vm259, %v335, 0
    %v462 = vsel %vm259, %v341, 0
    %464 = vmatprep.subr.mxu0 0.0
    %465 = vmatpush1.xpose.msra.mxu0 0.0
    %466 = vmatprep.subr.mxu0 0.0
    %467 = vmatpush1.xpose.msra.mxu0 0.0
    %468 = vmatprep.subr.mxu0 0.0
    %469 = vmatpush1.xpose.msra.mxu0 0.0
    %470 = vmatprep.subr.mxu0 0.0
    %471 = vmatpush1.xpose.msra.mxu0 0.0
    %472 = vmatprep.subr.mxu0 0.0
    %473 = vmatpush1.xpose.msra.mxu0 0.0
    %474 = vmatprep.subr.mxu0 0.0
    %475 = vmatpush1.xpose.msra.mxu0 0.0
    %476 = vmatprep.subr.mxu0 0.0
    %477 = vmatpush1.xpose.msra.mxu0 0.0
    %478 = vmatprep.subr.mxu0 0.0
    %479 = vmatpush1.xpose.msra.mxu0 0.0
    %480 = vmatprep.subr.mxu0 0.0
    %481 = vmatpush1.xpose.msra.mxu0 0.0
    %482 = vmatprep.subr.mxu0 0.0
    %483 = vmatpush1.xpose.msra.mxu0 0.0
    %484 = vmatprep.subr.mxu0 0.0
    %485 = vmatpush1.xpose.msra.mxu0 0.0
    %486 = vmatprep.subr.mxu0 0.0
    %487 = vmatpush1.xpose.msra.mxu0 0.0
    %488 = vmatprep.subr.mxu0 0.0
    %489 = vmatpush1.xpose.msra.mxu0 0.0
    %490 = vmatprep.subr.mxu0 0.0
    %491 = vmatpush1.xpose.msra.mxu0 0.0
    %492 = vmatprep.subr.mxu0 0.0
    %493 = vmatpush1.xpose.msra.mxu0 %v462
    %494 = vmatprep.subr.mxu0 0.0
    %495 = vmatpush1.xpose.msra.mxu0 %v459
    %496 = vmatprep.subr.mxu0 0.0
    %497 = vmatpush2.xpose.msra.mxu0 0.0
    %498 = vmatprep.subr.mxu0 0.0
    %499 = vmatpush2.xpose.msra.mxu0 0.0
    %500 = vmatprep.subr.mxu0 0.0
    %501 = vmatpush2.xpose.msra.mxu0 0.0
    %502 = vmatprep.subr.mxu0 0.0
    %503 = vmatpush2.xpose.msra.mxu0 0.0
    %504 = vmatprep.subr.mxu0 0.0
    %505 = vmatpush2.xpose.msra.mxu0 0.0
    %506 = vmatprep.subr.mxu0 0.0
    %507 = vmatpush2.xpose.msra.mxu0 0.0
    %508 = vmatprep.subr.mxu0 0.0
    %509 = vmatpush2.xpose.msra.mxu0 0.0
    %510 = vmatprep.subr.mxu0 0.0
    %511 = vmatpush2.xpose.msra.mxu0 0.0
    %512 = vmatprep.subr.mxu0 0.0
    %513 = vmatpush2.xpose.msra.mxu0 0.0
    %514 = vmatprep.subr.mxu0 0.0
    %515 = vmatpush2.xpose.msra.mxu0 0.0
    %516 = vmatprep.subr.mxu0 0.0
    %517 = vmatpush2.xpose.msra.mxu0 0.0
    %518 = vmatprep.subr.mxu0 0.0
    %519 = vmatpush2.xpose.msra.mxu0 0.0
    %520 = vmatprep.subr.mxu0 0.0
    %521 = vmatpush2.xpose.msra.mxu0 0.0
    %522 = vmatprep.subr.mxu0 0.0
    %523 = vmatpush2.xpose.msra.mxu0 0.0
    %524 = vmatprep.subr.mxu0 0.0
    %525 = vmatpush2.xpose.msra.mxu0 0.0
    %526 = vmatprep.subr.mxu0 0.0
    %527 = vmatpush2.xpose.msra.mxu0 0.0
    %528 = vmatprep.mubr.f32.mxu0 0.0
    %529 = vmatmul.mubr.f32.gmra.mxu0 %v444
    %v530 = vpop.f32.mrf.mxu0
    %v531 = vadd.f32 0.0, %v530
    %v532 = vpop.f32.mrf.mxu0
    %533 = vmatprep.mubr.f32.mxu0 0.0
    %534 = vmatmul.mubr.f32.gmra.mxu0 %v447
    %v535 = vpop.f32.mrf.mxu0
    %v536 = vadd.f32 0.0, %v535
    %v537 = vpop.f32.mrf.mxu0
    %538 = vmatprep.mubr.f32.mxu0 0.0
    %539 = vmatmul.mubr.f32.gmra.mxu0 %v450
    %v540 = vpop.f32.mrf.mxu0
    %v541 = vadd.f32 0.0, %v540
    %v542 = vpop.f32.mrf.mxu0
    %543 = vmatprep.mubr.f32.mxu0 0.0
    %544 = vmatmul.mubr.f32.gmra.mxu0 %v453
    %v545 = vpop.f32.mrf.mxu0
    %v546 = vadd.f32 0.0, %v545
    %v547 = vpop.f32.mrf.mxu0
    %548 = vmatprep.mubr.f32.mxu0 0.0
    %549 = vmatmul.mubr.f32.gmra.mxu0 %v456
    %v550 = vpop.f32.mrf.mxu0
    %v551 = vadd.f32 0.0, %v550
    %v552 = vpop.f32.mrf.mxu0
    %553 = vdwg.mxu0
    %v554 = vsel %vm207, %v217, %v531
    %v555 = vsel %vm208, %v218, %v536
    %v556 = vsel %vm209, %v219, %v541
    %v557 = vsel %vm210, %v220, %v546
    %v558 = vsel %vm211, %v221, %v551
    %vm559 = vcmask 80896
    %v560 = vsel %vm559, %v554, -inf
    %561 = vmax.xlane.f32.xlu0 %v560
    %v562 = vpop.xlane.xlu0 %561
    %v563 = vsel %vm559, %v555, -inf
    %564 = vmax.xlane.f32.xlu0 %v563
    %v565 = vpop.xlane.xlu0 %564
    %v566 = vsel %vm559, %v556, -inf
    %567 = vmax.xlane.f32.xlu0 %v566
    %v568 = vpop.xlane.xlu0 %567
    %v569 = vsel %vm559, %v557, -inf
    %570 = vmax.xlane.f32.xlu0 %v569
    %v571 = vpop.xlane.xlu0 %570
    %v572 = vsel %vm559, %v558, -inf
    %573 = vmax.xlane.f32.xlu0 %v572
    %v574 = vpop.xlane.xlu0 %573
    %v575 = vsub.f32 %v554, %v562
    %v576 = vsub.f32 %v555, %v565
    %v577 = vsub.f32 %v556, %v568
    %v578 = vsub.f32 %v557, %v571
    %v579 = vsub.f32 %v558, %v574
    %v580 = vmul.f32 %v575, 1.442695
    %v581 = vpow.pop %v580
    %v582 = vmul.f32 %v576, 1.442695
    %v583 = vpow.pop %v582
    %v584 = vmul.f32 %v577, 1.442695
    %v585 = vpow.pop %v584
    %v586 = vmul.f32 %v578, 1.442695
    %v587 = vpow.pop %v586
    %v588 = vmul.f32 %v579, 1.442695
    %v589 = vpow.pop %v588
    %v590 = vsel %vm559, %v581, 0.0
    %591 = vadd.xlane.f32.xlu0 %v590
    %v592 = vpop.xlane.xlu0 %591
    %v593 = vsel %vm559, %v583, 0.0
    %594 = vadd.xlane.f32.xlu0 %v593
    %v595 = vpop.xlane.xlu0 %594
    %v596 = vsel %vm559, %v585, 0.0
    %597 = vadd.xlane.f32.xlu0 %v596
    %v598 = vpop.xlane.xlu0 %597
    %v599 = vsel %vm559, %v587, 0.0
    %600 = vadd.xlane.f32.xlu0 %v599
    %v601 = vpop.xlane.xlu0 %600
    %v602 = vsel %vm559, %v589, 0.0
    %603 = vadd.xlane.f32.xlu0 %v602
    %v604 = vpop.xlane.xlu0 %603
    %v605 = vrcp.pop %v592
    %v606 = vmul.f32 %v581, %v605
    %v607 = vrcp.pop %v595
    %v608 = vmul.f32 %v583, %v607
    %v609 = vrcp.pop %v598
    %v610 = vmul.f32 %v585, %v609
    %v611 = vrcp.pop %v601
    %v612 = vmul.f32 %v587, %v611
    %v613 = vrcp.pop %v604
    %v614 = vmul.f32 %v589, %v613
    %615 = vst.msk [vmem:[%s4] sm:$0xff] %vm559, %v606
    %616 = vst.msk [vmem:[%s4 + $0x8] sm:$0xff] %vm559, %v608
    %617 = vst.msk [vmem:[%s4 + $0x10] sm:$0xff] %vm559, %v610
    %618 = vst.msk [vmem:[%s4 + $0x18] sm:$0xff] %vm559, %v612
    %619 = vst.msk [vmem:[%s4 + $0x20] sm:$0xff] %vm559, %v614
    %v621 = vsel %vm559, %v606, 0
    %v624 = vsel %vm559, %v608, 0
    %v627 = vsel %vm559, %v610, 0
    %v630 = vsel %vm559, %v612, 0
    %v633 = vsel %vm559, %v614, 0
    %v636 = vsel %vm160, %v415, 0
    %638 = vmatprep.subr.mxu0 0.0
    %639 = vmatpush1.msra.mxu0 0.0
    %640 = vmatprep.subr.mxu0 0.0
    %641 = vmatpush1.msra.mxu0 0.0
    %642 = vmatprep.subr.mxu0 0.0
    %643 = vmatpush1.msra.mxu0 0.0
    %644 = vmatprep.subr.mxu0 0.0
    %645 = vmatpush1.msra.mxu0 0.0
    %646 = vmatprep.subr.mxu0 0.0
    %647 = vmatpush1.msra.mxu0 0.0
    %648 = vmatprep.subr.mxu0 0.0
    %649 = vmatpush1.msra.mxu0 0.0
    %650 = vmatprep.subr.mxu0 0.0
    %651 = vmatpush1.msra.mxu0 0.0
    %652 = vmatprep.subr.mxu0 0.0
    %653 = vmatpush1.msra.mxu0 0.0
    %654 = vmatprep.subr.mxu0 0.0
    %655 = vmatpush1.msra.mxu0 0.0
    %656 = vmatprep.subr.mxu0 0.0
    %657 = vmatpush1.msra.mxu0 0.0
    %658 = vmatprep.subr.mxu0 0.0
    %659 = vmatpush1.msra.mxu0 0.0
    %660 = vmatprep.subr.mxu0 0.0
    %661 = vmatpush1.msra.mxu0 0.0
    %662 = vmatprep.subr.mxu0 0.0
    %663 = vmatpush1.msra.mxu0 0.0
    %664 = vmatprep.subr.mxu0 0.0
    %665 = vmatpush1.msra.mxu0 0.0
    %666 = vmatprep.subr.mxu0 0.0
    %667 = vmatpush1.msra.mxu0 %v636
    %668 = vmatprep.subr.mxu0 0.0
    %669 = vmatpush1.msra.mxu0 %v410
    %670 = vmatprep.subr.mxu0 0.0
    %671 = vmatpush2.msra.mxu0 0.0
    %672 = vmatprep.subr.mxu0 0.0
    %673 = vmatpush2.msra.mxu0 0.0
    %674 = vmatprep.subr.mxu0 0.0
    %675 = vmatpush2.msra.mxu0 0.0
    %676 = vmatprep.subr.mxu0 0.0
    %677 = vmatpush2.msra.mxu0 0.0
    %678 = vmatprep.subr.mxu0 0.0
    %679 = vmatpush2.msra.mxu0 0.0
    %680 = vmatprep.subr.mxu0 0.0
    %681 = vmatpush2.msra.mxu0 0.0
    %682 = vmatprep.subr.mxu0 0.0
    %683 = vmatpush2.msra.mxu0 0.0
    %684 = vmatprep.subr.mxu0 0.0
    %685 = vmatpush2.msra.mxu0 0.0
    %686 = vmatprep.subr.mxu0 0.0
    %687 = vmatpush2.msra.mxu0 0.0
    %688 = vmatprep.subr.mxu0 0.0
    %689 = vmatpush2.msra.mxu0 0.0
    %690 = vmatprep.subr.mxu0 0.0
    %691 = vmatpush2.msra.mxu0 0.0
    %692 = vmatprep.subr.mxu0 0.0
    %693 = vmatpush2.msra.mxu0 0.0
    %694 = vmatprep.subr.mxu0 0.0
    %695 = vmatpush2.msra.mxu0 0.0
    %696 = vmatprep.subr.mxu0 0.0
    %697 = vmatpush2.msra.mxu0 0.0
    %698 = vmatprep.subr.mxu0 0.0
    %699 = vmatpush2.msra.mxu0 0.0
    %700 = vmatprep.subr.mxu0 0.0
    %701 = vmatpush2.msra.mxu0 0.0
    %702 = vmatprep.mubr.f32.mxu0 0.0
    %703 = vmatmul.mubr.f32.gmra.mxu0 %v621
    %v704 = vpop.f32.mrf.mxu0
    %v705 = vadd.f32 0.0, %v704
    %v706 = vpop.f32.mrf.mxu0
    %707 = vmatprep.mubr.f32.mxu0 0.0
    %708 = vmatmul.mubr.f32.gmra.mxu0 %v624
    %v709 = vpop.f32.mrf.mxu0
    %v710 = vadd.f32 0.0, %v709
    %v711 = vpop.f32.mrf.mxu0
    %712 = vmatprep.mubr.f32.mxu0 0.0
    %713 = vmatmul.mubr.f32.gmra.mxu0 %v627
    %v714 = vpop.f32.mrf.mxu0
    %v715 = vadd.f32 0.0, %v714
    %v716 = vpop.f32.mrf.mxu0
    %717 = vmatprep.mubr.f32.mxu0 0.0
    %718 = vmatmul.mubr.f32.gmra.mxu0 %v630
    %v719 = vpop.f32.mrf.mxu0
    %v720 = vadd.f32 0.0, %v719
    %v721 = vpop.f32.mrf.mxu0
    %722 = vmatprep.mubr.f32.mxu0 0.0
    %723 = vmatmul.mubr.f32.gmra.mxu0 %v633
    %v724 = vpop.f32.mrf.mxu0
    %v725 = vadd.f32 0.0, %v724
    %v726 = vpop.f32.mrf.mxu0
    %727 = vdwg.mxu0
    %v728 = vmul.f32 %v705, %v144
    %v729 = vmul.f32 %v710, %v161
    %v730 = vmul.f32 %v715, %v163
    %v731 = vmul.f32 %v720, %v165
    %v732 = vmul.f32 %v725, %v159
    %v735 = vrot.slane %v729, 2
    %v736 = vrot.slane %v730, 2
    %v737 = vsel %vm164, %v735, %v736
    %v740 = vadd.f32 %v728, %v737
    %v741 = vadd.f32 %v729, %v736
    %v743 = vrot.slane %v730, 4
    %v744 = vrot.slane %v731, 4
    %v745 = vsel %vm162, %v743, %v744
    %v748 = vadd.f32 %v740, %v745
    %v749 = vadd.f32 %v741, %v744
    %v751 = vrot.slane %v731, 6
    %v752 = vrot.slane %v732, 6
    %v753 = vsel %vm160, %v751, %v752
    %v756 = vadd.f32 %v748, %v753
    %v757 = vadd.f32 %v749, %v752
    %v758 = vld [vmem:[#allocation2 + $0x18] sm:$0xff]
    %v759 = vld [vmem:[#allocation2 + $0x48] sm:$0xff]
    %v760 = vld [vmem:[#allocation2 + $0x78] sm:$0xff]
    %v761 = vld [vmem:[#allocation2 + $0xa8] sm:$0xff]
    %v763 = vsel %vm259, %v756, 0
    %v766 = vsel %vm259, %v757, 0
    %768 = vmatprep.subr.mxu0 0.0
    %769 = vmatpush1.msra.mxu0 0.0
    %770 = vmatprep.subr.mxu0 0.0
    %771 = vmatpush1.msra.mxu0 0.0
    %772 = vmatprep.subr.mxu0 0.0
    %773 = vmatpush1.msra.mxu0 0.0
    %774 = vmatprep.subr.mxu0 0.0
    %775 = vmatpush1.msra.mxu0 0.0
    %776 = vmatprep.subr.mxu0 0.0
    %777 = vmatpush1.msra.mxu0 0.0
    %778 = vmatprep.subr.mxu0 0.0
    %779 = vmatpush1.msra.mxu0 0.0
    %780 = vmatprep.subr.mxu0 0.0
    %781 = vmatpush1.msra.mxu0 0.0
    %782 = vmatprep.subr.mxu0 0.0
    %783 = vmatpush1.msra.mxu0 0.0
    %784 = vmatprep.subr.mxu0 0.0
    %785 = vmatpush1.msra.mxu0 0.0
    %786 = vmatprep.subr.mxu0 0.0
    %787 = vmatpush1.msra.mxu0 0.0
    %788 = vmatprep.subr.mxu0 0.0
    %789 = vmatpush1.msra.mxu0 0.0
    %790 = vmatprep.subr.mxu0 0.0
    %791 = vmatpush1.msra.mxu0 0.0
    %792 = vmatprep.subr.mxu0 0.0
    %793 = vmatpush1.msra.mxu0 %v761
    %794 = vmatprep.subr.mxu0 0.0
    %795 = vmatpush1.msra.mxu0 %v760
    %796 = vmatprep.subr.mxu0 0.0
    %797 = vmatpush1.msra.mxu0 %v759
    %798 = vmatprep.subr.mxu0 0.0
    %799 = vmatpush1.msra.mxu0 %v758
    %800 = vmatprep.subr.mxu0 0.0
    %801 = vmatpush2.msra.mxu0 0.0
    %802 = vmatprep.subr.mxu0 0.0
    %803 = vmatpush2.msra.mxu0 0.0
    %804 = vmatprep.subr.mxu0 0.0
    %805 = vmatpush2.msra.mxu0 0.0
    %806 = vmatprep.subr.mxu0 0.0
    %807 = vmatpush2.msra.mxu0 0.0
    %808 = vmatprep.subr.mxu0 0.0
    %809 = vmatpush2.msra.mxu0 0.0
    %810 = vmatprep.subr.mxu0 0.0
    %811 = vmatpush2.msra.mxu0 0.0
    %812 = vmatprep.subr.mxu0 0.0
    %813 = vmatpush2.msra.mxu0 0.0
    %814 = vmatprep.subr.mxu0 0.0
    %815 = vmatpush2.msra.mxu0 0.0
    %816 = vmatprep.subr.mxu0 0.0
    %817 = vmatpush2.msra.mxu0 0.0
    %818 = vmatprep.subr.mxu0 0.0
    %819 = vmatpush2.msra.mxu0 0.0
    %820 = vmatprep.subr.mxu0 0.0
    %821 = vmatpush2.msra.mxu0 0.0
    %822 = vmatprep.subr.mxu0 0.0
    %823 = vmatpush2.msra.mxu0 0.0
    %824 = vmatprep.subr.mxu0 0.0
    %825 = vmatpush2.msra.mxu0 0.0
    %826 = vmatprep.subr.mxu0 0.0
    %827 = vmatpush2.msra.mxu0 0.0
    %828 = vmatprep.subr.mxu0 0.0
    %829 = vmatpush2.msra.mxu0 0.0
    %830 = vmatprep.subr.mxu0 0.0
    %831 = vmatpush2.msra.mxu0 0.0
    %832 = vmatprep.mubr.f32.mxu0 0.0
    %833 = vmatmul.mubr.f32.gmra.mxu0 %v763
    %v834 = vpop.f32.mrf.mxu0
    %v835 = vadd.f32 %v224, %v834
    %v836 = vpop.f32.mrf.mxu0
    %837 = vmatprep.mubr.f32.mxu0 0.0
    %838 = vmatmul.mubr.f32.gmra.mxu0 %v766
    %v839 = vpop.f32.mrf.mxu0
    %v840 = vadd.f32 %v224, %v839
    %v841 = vpop.f32.mrf.mxu0
    %842 = vdwg.mxu0
    %v843 = vadd.f32 %v835, %v132
    %v844 = vadd.f32 %v840, %v137
    %v845 = vsel %vm259, %v843, 0.0
    %846 = vadd.xlane.f32.xlu0 %v845
    %v847 = vpop.xlane.xlu0 %846
    %vm848 = vcmask 254976
    %v849 = vsel %vm848, %v844, 0.0
    %850 = vadd.xlane.f32.xlu0 %v849
    %v851 = vpop.xlane.xlu0 %850
    %v852 = vrcp.pop 32.0
    %v853 = vmul.f32 %v847, %v852
    %v854 = vmul.f32 %v851, %v852
    %v855 = vsub.f32 %v843, %v853
    %v856 = vsub.f32 %v844, %v854
    %v857 = vmul.f32 %v855, %v855
    %v858 = vmul.f32 %v856, %v856
    %v859 = vsel %vm259, %v857, 0.0
    %860 = vadd.xlane.f32.xlu0 %v859
    %v861 = vpop.xlane.xlu0 %860
    %v862 = vsel %vm848, %v858, 0.0
    %863 = vadd.xlane.f32.xlu0 %v862
    %v864 = vpop.xlane.xlu0 %863
    %v865 = vmul.f32 %v861, %v852
    %v866 = vmul.f32 %v864, %v852
    %v867 = vadd.f32 %v865, 1e-05
    %v868 = vadd.f32 %v866, 1e-05
    %v869 = vrsqrt.pop %v867
    %v870 = vrsqrt.pop %v868
    %v871 = vmul.f32 %v855, %v869
    %v872 = vmul.f32 %v856, %v870
    %v873 = vmul.f32 %v871, %v225
    %v874 = vmul.f32 %v872, %v225
    %v875 = vadd.f32 %v873, %v226
    %v876 = vadd.f32 %v874, %v226
    %v877 = vld [vmem:[#allocation2 + $0x20] sm:$0xff]
    %v878 = vld [vmem:[#allocation2 + $0x50] sm:$0xff]
    %v879 = vld [vmem:[#allocation2 + $0x80] sm:$0xff]
    %v880 = vld [vmem:[#allocation2 + $0xb0] sm:$0xff]
    %v882 = vsel %vm259, %v875, 0
    %v885 = vsel %vm259, %v876, 0
    %887 = vmatprep.subr.mxu0 0.0
    %888 = vmatpush1.msra.mxu0 0.0
    %889 = vmatprep.subr.mxu0 0.0
    %890 = vmatpush1.msra.mxu0 0.0
    %891 = vmatprep.subr.mxu0 0.0
    %892 = vmatpush1.msra.mxu0 0.0
    %893 = vmatprep.subr.mxu0 0.0
    %894 = vmatpush1.msra.mxu0 0.0
    %895 = vmatprep.subr.mxu0 0.0
    %896 = vmatpush1.msra.mxu0 0.0
    %897 = vmatprep.subr.mxu0 0.0
    %898 = vmatpush1.msra.mxu0 0.0
    %899 = vmatprep.subr.mxu0 0.0
    %900 = vmatpush1.msra.mxu0 0.0
    %901 = vmatprep.subr.mxu0 0.0
    %902 = vmatpush1.msra.mxu0 0.0
    %903 = vmatprep.subr.mxu0 0.0
    %904 = vmatpush1.msra.mxu0 0.0
    %905 = vmatprep.subr.mxu0 0.0
    %906 = vmatpush1.msra.mxu0 0.0
    %907 = vmatprep.subr.mxu0 0.0
    %908 = vmatpush1.msra.mxu0 0.0
    %909 = vmatprep.subr.mxu0 0.0
    %910 = vmatpush1.msra.mxu0 0.0
    %911 = vmatprep.subr.mxu0 0.0
    %912 = vmatpush1.msra.mxu0 %v880
    %913 = vmatprep.subr.mxu0 0.0
    %914 = vmatpush1.msra.mxu0 %v879
    %915 = vmatprep.subr.mxu0 0.0
    %916 = vmatpush1.msra.mxu0 %v878
    %917 = vmatprep.subr.mxu0 0.0
    %918 = vmatpush1.msra.mxu0 %v877
    %919 = vmatprep.subr.mxu0 0.0
    %920 = vmatpush2.msra.mxu0 0.0
    %921 = vmatprep.subr.mxu0 0.0
    %922 = vmatpush2.msra.mxu0 0.0
    %923 = vmatprep.subr.mxu0 0.0
    %924 = vmatpush2.msra.mxu0 0.0
    %925 = vmatprep.subr.mxu0 0.0
    %926 = vmatpush2.msra.mxu0 0.0
    %927 = vmatprep.subr.mxu0 0.0
    %928 = vmatpush2.msra.mxu0 0.0
    %929 = vmatprep.subr.mxu0 0.0
    %930 = vmatpush2.msra.mxu0 0.0
    %931 = vmatprep.subr.mxu0 0.0
    %932 = vmatpush2.msra.mxu0 0.0
    %933 = vmatprep.subr.mxu0 0.0
    %934 = vmatpush2.msra.mxu0 0.0
    %935 = vmatprep.subr.mxu0 0.0
    %936 = vmatpush2.msra.mxu0 0.0
    %937 = vmatprep.subr.mxu0 0.0
    %938 = vmatpush2.msra.mxu0 0.0
    %939 = vmatprep.subr.mxu0 0.0
    %940 = vmatpush2.msra.mxu0 0.0
    %941 = vmatprep.subr.mxu0 0.0
    %942 = vmatpush2.msra.mxu0 0.0
    %943 = vmatprep.subr.mxu0 0.0
    %944 = vmatpush2.msra.mxu0 0.0
    %945 = vmatprep.subr.mxu0 0.0
    %946 = vmatpush2.msra.mxu0 0.0
    %947 = vmatprep.subr.mxu0 0.0
    %948 = vmatpush2.msra.mxu0 0.0
    %949 = vmatprep.subr.mxu0 0.0
    %950 = vmatpush2.msra.mxu0 0.0
    %951 = vmatprep.mubr.f32.mxu0 0.0
    %952 = vmatmul.mubr.f32.gmra.mxu0 %v882
    %v953 = vpop.f32.mrf.mxu0
    %v954 = vadd.f32 %v227, %v953
    %v955 = vpop.f32.mrf.mxu0
    %956 = vmatprep.mubr.f32.mxu0 0.0
    %957 = vmatmul.mubr.f32.gmra.mxu0 %v885
    %v958 = vpop.f32.mrf.mxu0
    %v959 = vadd.f32 %v227, %v958
    %v960 = vpop.f32.mrf.mxu0
    %961 = vdwg.mxu0
    %v962 = vmax.f32 %v954, 0.0
    %v963 = vmax.f32 %v959, 0.0
    %v964 = vld [vmem:[#allocation2 + $0x28] sm:$0xff]
    %v965 = vld [vmem:[#allocation2 + $0x58] sm:$0xff]
    %v966 = vld [vmem:[#allocation2 + $0x88] sm:$0xff]
    %v967 = vld [vmem:[#allocation2 + $0xb8] sm:$0xff]
    %vm968 = vcmask 523264
    %v970 = vsel %vm968, %v962, 0
    %v973 = vsel %vm968, %v963, 0
    %v976 = vsel %vm968, %v964, 0
    %v979 = vsel %vm968, %v965, 0
    %v982 = vsel %vm968, %v966, 0
    %v985 = vsel %vm968, %v967, 0
    %987 = vmatprep.subr.mxu0 0.0
    %988 = vmatpush1.xpose.msra.mxu0 0.0
    %989 = vmatprep.subr.mxu0 0.0
    %990 = vmatpush1.xpose.msra.mxu0 0.0
    %991 = vmatprep.subr.mxu0 0.0
    %992 = vmatpush1.xpose.msra.mxu0 0.0
    %993 = vmatprep.subr.mxu0 0.0
    %994 = vmatpush1.xpose.msra.mxu0 0.0
    %995 = vmatprep.subr.mxu0 0.0
    %996 = vmatpush1.xpose.msra.mxu0 0.0
    %997 = vmatprep.subr.mxu0 0.0
    %998 = vmatpush1.xpose.msra.mxu0 0.0
    %999 = vmatprep.subr.mxu0 0.0
    %1000 = vmatpush1.xpose.msra.mxu0 0.0
    %1001 = vmatprep.subr.mxu0 0.0
    %1002 = vmatpush1.xpose.msra.mxu0 0.0
    %1003 = vmatprep.subr.mxu0 0.0
    %1004 = vmatpush1.xpose.msra.mxu0 0.0
    %1005 = vmatprep.subr.mxu0 0.0
    %1006 = vmatpush1.xpose.msra.mxu0 0.0
    %1007 = vmatprep.subr.mxu0 0.0
    %1008 = vmatpush1.xpose.msra.mxu0 0.0
    %1009 = vmatprep.subr.mxu0 0.0
    %1010 = vmatpush1.xpose.msra.mxu0 0.0
    %1011 = vmatprep.subr.mxu0 0.0
    %1012 = vmatpush1.xpose.msra.mxu0 %v985
    %1013 = vmatprep.subr.mxu0 0.0
    %1014 = vmatpush1.xpose.msra.mxu0 %v982
    %1015 = vmatprep.subr.mxu0 0.0
    %1016 = vmatpush1.xpose.msra.mxu0 %v979
    %1017 = vmatprep.subr.mxu0 0.0
    %1018 = vmatpush1.xpose.msra.mxu0 %v976
    %1019 = vmatprep.subr.mxu0 0.0
    %1020 = vmatpush2.xpose.msra.mxu0 0.0
    %1021 = vmatprep.subr.mxu0 0.0
    %1022 = vmatpush2.xpose.msra.mxu0 0.0
    %1023 = vmatprep.subr.mxu0 0.0
    %1024 = vmatpush2.xpose.msra.mxu0 0.0
    %1025 = vmatprep.subr.mxu0 0.0
    %1026 = vmatpush2.xpose.msra.mxu0 0.0
    %1027 = vmatprep.subr.mxu0 0.0
    %1028 = vmatpush2.xpose.msra.mxu0 0.0
    %1029 = vmatprep.subr.mxu0 0.0
    %1030 = vmatpush2.xpose.msra.mxu0 0.0
    %1031 = vmatprep.subr.mxu0 0.0
    %1032 = vmatpush2.xpose.msra.mxu0 0.0
    %1033 = vmatprep.subr.mxu0 0.0
    %1034 = vmatpush2.xpose.msra.mxu0 0.0
    %1035 = vmatprep.subr.mxu0 0.0
    %1036 = vmatpush2.xpose.msra.mxu0 0.0
    %1037 = vmatprep.subr.mxu0 0.0
    %1038 = vmatpush2.xpose.msra.mxu0 0.0
    %1039 = vmatprep.subr.mxu0 0.0
    %1040 = vmatpush2.xpose.msra.mxu0 0.0
    %1041 = vmatprep.subr.mxu0 0.0
    %1042 = vmatpush2.xpose.msra.mxu0 0.0
    %1043 = vmatprep.subr.mxu0 0.0
    %1044 = vmatpush2.xpose.msra.mxu0 0.0
    %1045 = vmatprep.subr.mxu0 0.0
    %1046 = vmatpush2.xpose.msra.mxu0 0.0
    %1047 = vmatprep.subr.mxu0 0.0
    %1048 = vmatpush2.xpose.msra.mxu0 0.0
    %1049 = vmatprep.subr.mxu0 0.0
    %1050 = vmatpush2.xpose.msra.mxu0 0.0
    %1051 = vmatprep.mubr.f32.mxu0 0.0
    %1052 = vmatmul.mubr.f32.gmra.mxu0 %v970
    %v1053 = vpop.f32.mrf.mxu0
    %v1054 = vadd.f32 %v228, %v1053
    %v1055 = vpop.f32.mrf.mxu0
    %1056 = vmatprep.mubr.f32.mxu0 0.0
    %1057 = vmatmul.mubr.f32.gmra.mxu0 %v973
    %v1058 = vpop.f32.mrf.mxu0
    %v1059 = vadd.f32 %v228, %v1058
    %v1060 = vpop.f32.mrf.mxu0
    %1061 = vdwg.mxu0
    %v1062 = vadd.f32 %v1054, %v875
    %v1063 = vadd.f32 %v1059, %v876
    %v1064 = vsel %vm259, %v1062, 0.0
    %1065 = vadd.xlane.f32.xlu0 %v1064
    %v1066 = vpop.xlane.xlu0 %1065
    %v1067 = vsel %vm848, %v1063, 0.0
    %1068 = vadd.xlane.f32.xlu0 %v1067
    %v1069 = vpop.xlane.xlu0 %1068
    %v1070 = vmul.f32 %v1066, %v852
    %v1071 = vmul.f32 %v1069, %v852
    %v1072 = vsub.f32 %v1062, %v1070
    %v1073 = vsub.f32 %v1063, %v1071
    %v1074 = vmul.f32 %v1072, %v1072
    %v1075 = vmul.f32 %v1073, %v1073
    %v1076 = vsel %vm259, %v1074, 0.0
    %1077 = vadd.xlane.f32.xlu0 %v1076
    %v1078 = vpop.xlane.xlu0 %1077
    %v1079 = vsel %vm848, %v1075, 0.0
    %1080 = vadd.xlane.f32.xlu0 %v1079
    %v1081 = vpop.xlane.xlu0 %1080
    %v1082 = vmul.f32 %v1078, %v852
    %v1083 = vmul.f32 %v1081, %v852
    %v1084 = vadd.f32 %v1082, 1e-05
    %v1085 = vadd.f32 %v1083, 1e-05
    %v1086 = vrsqrt.pop %v1084
    %v1087 = vrsqrt.pop %v1085
    %v1088 = vmul.f32 %v1072, %v1086
    %v1089 = vmul.f32 %v1073, %v1087
    %v1090 = vmul.f32 %v1088, %v229
    %v1091 = vmul.f32 %v1089, %v229
    %v1092 = vadd.f32 %v1090, %v230
    %v1093 = vadd.f32 %v1091, %v230
    %s1094 = scalar_lea.vmem [#allocation2], 240
    %s1095 = scalar_lea.vmem %s1094, 192 [#allocation2]
    %v1096 = vld [vmem:[%s1095] ss:$8 sm:$0x7]
    %v1097 = vld [vmem:[%s1094 + $0xd8] ss:$0 sm:$0xff]
    %v1098 = vld [vmem:[%s1094 + $0xe0] ss:$0 sm:$0xff]
    %v1099 = vld [vmem:[%s1094 + $0xe8] ss:$0 sm:$0xff]
    %v1100 = vld [vmem:[%s1094 + $0xc1] ss:$0 sm:$0xff]
    %v1101 = vld [vmem:[%s1094 + $0xc9] ss:$0 sm:$0xff]
    %v1102 = vld [vmem:[%s1094 + $0xd1] ss:$0 sm:$0xff]
    %v1103 = vld [vmem:[%s1094 + $0xd9] ss:$0 sm:$0xff]
    %v1104 = vld [vmem:[%s1094] sm:$0xff]
    %v1105 = vld [vmem:[%s1094 + $0x8] sm:$0xff]
    %v1106 = vld [vmem:[%s1094 + $0x10] sm:$0xff]
    %v1107 = vld [vmem:[%s1094 + $0x30] sm:$0xff]
    %v1108 = vld [vmem:[%s1094 + $0x38] sm:$0xff]
    %v1109 = vld [vmem:[%s1094 + $0x40] sm:$0xff]
    %v1110 = vld [vmem:[%s1094 + $0x60] sm:$0xff]
    %v1111 = vld [vmem:[%s1094 + $0x68] sm:$0xff]
    %v1112 = vld [vmem:[%s1094 + $0x70] sm:$0xff]
    %v1113 = vld [vmem:[%s1094 + $0x90] sm:$0xff]
    %v1114 = vld [vmem:[%s1094 + $0x98] sm:$0xff]
    %v1115 = vld [vmem:[%s1094 + $0xa0] sm:$0xff]
    %v1117 = vlaneseq
    %v1118 = vshrl.u32 %v1117, 7
    %v1119 = vsub.s32 0, %v1118
    %v1120 = vrot.slane %v1096, %v1119
    %v1121 = vlaneseq
    %v1122 = vshrl.u32 %v1121, 7
    %v1123 = vsub.s32 1, %v1122
    %v1124 = vrot.slane %v1096, %v1123
    %v1125 = vlaneseq
    %v1126 = vshrl.u32 %v1125, 7
    %v1127 = vsub.s32 2, %v1126
    %v1128 = vrot.slane %v1096, %v1127
    %v1133 = vsel %vm259, %v1092, 0
    %v1136 = vsel %vm259, %v1093, 0
    %1138 = vmatprep.subr.mxu0 0.0
    %1139 = vmatpush1.msra.mxu0 0.0
    %1140 = vmatprep.subr.mxu0 0.0
    %1141 = vmatpush1.msra.mxu0 0.0
    %1142 = vmatprep.subr.mxu0 0.0
    %1143 = vmatpush1.msra.mxu0 0.0
    %1144 = vmatprep.subr.mxu0 0.0
    %1145 = vmatpush1.msra.mxu0 0.0
    %1146 = vmatprep.subr.mxu0 0.0
    %1147 = vmatpush1.msra.mxu0 0.0
    %1148 = vmatprep.subr.mxu0 0.0
    %1149 = vmatpush1.msra.mxu0 0.0
    %1150 = vmatprep.subr.mxu0 0.0
    %1151 = vmatpush1.msra.mxu0 0.0
    %1152 = vmatprep.subr.mxu0 0.0
    %1153 = vmatpush1.msra.mxu0 0.0
    %1154 = vmatprep.subr.mxu0 0.0
    %1155 = vmatpush1.msra.mxu0 0.0
    %1156 = vmatprep.subr.mxu0 0.0
    %1157 = vmatpush1.msra.mxu0 0.0
    %1158 = vmatprep.subr.mxu0 0.0
    %1159 = vmatpush1.msra.mxu0 0.0
    %1160 = vmatprep.subr.mxu0 0.0
    %1161 = vmatpush1.msra.mxu0 0.0
    %1162 = vmatprep.subr.mxu0 %v1114
    %1163 = vmatpush1.msra.mxu0 %v1113
    %1164 = vmatprep.subr.mxu0 %v1111
    %1165 = vmatpush1.msra.mxu0 %v1110
    %1166 = vmatprep.subr.mxu0 %v1108
    %1167 = vmatpush1.msra.mxu0 %v1107
    %1168 = vmatprep.subr.mxu0 %v1105
    %1169 = vmatpush1.msra.mxu0 %v1104
    %1170 = vmatprep.subr.mxu0 0.0
    %1171 = vmatpush2.msra.mxu0 0.0
    %1172 = vmatprep.subr.mxu0 0.0
    %1173 = vmatpush2.msra.mxu0 0.0
    %1174 = vmatprep.subr.mxu0 0.0
    %1175 = vmatpush2.msra.mxu0 0.0
    %1176 = vmatprep.subr.mxu0 0.0
    %1177 = vmatpush2.msra.mxu0 0.0
    %1178 = vmatprep.subr.mxu0 0.0
    %1179 = vmatpush2.msra.mxu0 0.0
    %1180 = vmatprep.subr.mxu0 0.0
    %1181 = vmatpush2.msra.mxu0 0.0
    %1182 = vmatprep.subr.mxu0 0.0
    %1183 = vmatpush2.msra.mxu0 0.0
    %1184 = vmatprep.subr.mxu0 0.0
    %1185 = vmatpush2.msra.mxu0 0.0
    %1186 = vmatprep.subr.mxu0 0.0
    %1187 = vmatpush2.msra.mxu0 0.0
    %1188 = vmatprep.subr.mxu0 0.0
    %1189 = vmatpush2.msra.mxu0 0.0
    %1190 = vmatprep.subr.mxu0 0.0
    %1191 = vmatpush2.msra.mxu0 0.0
    %1192 = vmatprep.subr.mxu0 0.0
    %1193 = vmatpush2.msra.mxu0 0.0
    %1194 = vmatprep.subr.mxu0 0.0
    %1195 = vmatpush2.msra.mxu0 0.0
    %1196 = vmatprep.subr.mxu0 0.0
    %1197 = vmatpush2.msra.mxu0 0.0
    %1198 = vmatprep.subr.mxu0 0.0
    %1199 = vmatpush2.msra.mxu0 0.0
    %1200 = vmatprep.subr.mxu0 0.0
    %1201 = vmatpush2.msra.mxu0 0.0
    %1202 = vmatprep.mubr.f32.mxu0 0.0
    %1203 = vmatmul.mubr.f32.gmra.mxu0 %v1133
    %v1204 = vpop.f32.mrf.mxu0
    %v1205 = vadd.f32 %v1120, %v1204
    %v1206 = vpop.f32.mrf.mxu0
    %v1207 = vadd.f32 %v1124, %v1206
    %1208 = vmatprep.mubr.f32.mxu0 0.0
    %1209 = vmatmul.mubr.f32.gmra.mxu0 %v1136
    %v1210 = vpop.f32.mrf.mxu0
    %v1211 = vadd.f32 %v1120, %v1210
    %v1212 = vpop.f32.mrf.mxu0
    %v1213 = vadd.f32 %v1124, %v1212
    %1214 = vdwg.mxu0
    %1215 = vmatprep.subr.mxu0 0.0
    %1216 = vmatpush1.msra.mxu0 0.0
    %1217 = vmatprep.subr.mxu0 0.0
    %1218 = vmatpush1.msra.mxu0 0.0
    %1219 = vmatprep.subr.mxu0 0.0
    %1220 = vmatpush1.msra.mxu0 0.0
    %1221 = vmatprep.subr.mxu0 0.0
    %1222 = vmatpush1.msra.mxu0 0.0
    %1223 = vmatprep.subr.mxu0 0.0
    %1224 = vmatpush1.msra.mxu0 0.0
    %1225 = vmatprep.subr.mxu0 0.0
    %1226 = vmatpush1.msra.mxu0 0.0
    %1227 = vmatprep.subr.mxu0 0.0
    %1228 = vmatpush1.msra.mxu0 0.0
    %1229 = vmatprep.subr.mxu0 0.0
    %1230 = vmatpush1.msra.mxu0 0.0
    %1231 = vmatprep.subr.mxu0 0.0
    %1232 = vmatpush1.msra.mxu0 0.0
    %1233 = vmatprep.subr.mxu0 0.0
    %1234 = vmatpush1.msra.mxu0 0.0
    %1235 = vmatprep.subr.mxu0 0.0
    %1236 = vmatpush1.msra.mxu0 0.0
    %1237 = vmatprep.subr.mxu0 0.0
    %1238 = vmatpush1.msra.mxu0 0.0
    %1239 = vmatprep.subr.mxu0 0.0
    %1240 = vmatpush1.msra.mxu0 %v1115
    %1241 = vmatprep.subr.mxu0 0.0
    %1242 = vmatpush1.msra.mxu0 %v1112
    %1243 = vmatprep.subr.mxu0 0.0
    %1244 = vmatpush1.msra.mxu0 %v1109
    %1245 = vmatprep.subr.mxu0 0.0
    %1246 = vmatpush1.msra.mxu0 %v1106
    %1247 = vmatprep.subr.mxu0 0.0
    %1248 = vmatpush2.msra.mxu0 0.0
    %1249 = vmatprep.subr.mxu0 0.0
    %1250 = vmatpush2.msra.mxu0 0.0
    %1251 = vmatprep.subr.mxu0 0.0
    %1252 = vmatpush2.msra.mxu0 0.0
    %1253 = vmatprep.subr.mxu0 0.0
    %1254 = vmatpush2.msra.mxu0 0.0
    %1255 = vmatprep.subr.mxu0 0.0
    %1256 = vmatpush2.msra.mxu0 0.0
    %1257 = vmatprep.subr.mxu0 0.0
    %1258 = vmatpush2.msra.mxu0 0.0
    %1259 = vmatprep.subr.mxu0 0.0
    %1260 = vmatpush2.msra.mxu0 0.0
    %1261 = vmatprep.subr.mxu0 0.0
    %1262 = vmatpush2.msra.mxu0 0.0
    %1263 = vmatprep.subr.mxu0 0.0
    %1264 = vmatpush2.msra.mxu0 0.0
    %1265 = vmatprep.subr.mxu0 0.0
    %1266 = vmatpush2.msra.mxu0 0.0
    %1267 = vmatprep.subr.mxu0 0.0
    %1268 = vmatpush2.msra.mxu0 0.0
    %1269 = vmatprep.subr.mxu0 0.0
    %1270 = vmatpush2.msra.mxu0 0.0
    %1271 = vmatprep.subr.mxu0 0.0
    %1272 = vmatpush2.msra.mxu0 0.0
    %1273 = vmatprep.subr.mxu0 0.0
    %1274 = vmatpush2.msra.mxu0 0.0
    %1275 = vmatprep.subr.mxu0 0.0
    %1276 = vmatpush2.msra.mxu0 0.0
    %1277 = vmatprep.subr.mxu0 0.0
    %1278 = vmatpush2.msra.mxu0 0.0
    %1279 = vmatprep.mubr.f32.mxu0 0.0
    %1280 = vmatmul.mubr.f32.gmra.mxu0 %v1133
    %v1281 = vpop.f32.mrf.mxu0
    %v1282 = vadd.f32 %v1128, %v1281
    %v1283 = vpop.f32.mrf.mxu0
    %1284 = vmatprep.mubr.f32.mxu0 0.0
    %1285 = vmatmul.mubr.f32.gmra.mxu0 %v1136
    %v1286 = vpop.f32.mrf.mxu0
    %v1287 = vadd.f32 %v1128, %v1286
    %v1288 = vpop.f32.mrf.mxu0
    %1289 = vdwg.mxu0
    %v1292 = vrot.slane %v1205, 6
    %v1293 = vrot.slane %v1211, 6
    %v1294 = vsel %vm160, %v1292, %v1293
    %v1297 = vrot.slane %v1205, 4
    %v1298 = vrot.slane %v1211, 4
    %v1299 = vsel %vm162, %v1297, %v1298
    %v1302 = vrot.slane %v1205, 2
    %v1303 = vrot.slane %v1211, 2
    %v1304 = vsel %vm164, %v1302, %v1303
    %v1307 = vsel %vm160, %v1211, %v1292
    %v1308 = vsel %vm162, %v1294, %v1297
    %v1309 = vsel %vm164, %v1299, %v1302
    %v1310 = vmul.f32 %v1205, %v144
    %v1311 = vmul.f32 %v1307, %v161
    %v1312 = vmul.f32 %v1308, %v163
    %v1313 = vmul.f32 %v1309, %v165
    %v1314 = vmul.f32 %v1304, %v159
    %v1316 = vsel %vm259, %v1310, 0
    %v1319 = vsel %vm259, %v1311, 0
    %v1322 = vsel %vm259, %v1312, 0
    %v1325 = vsel %vm259, %v1313, 0
    %v1328 = vsel %vm259, %v1314, 0
    %v1331 = vsel %vm259, %v1207, 0
    %v1334 = vsel %vm259, %v1213, 0
    %1336 = vmatprep.subr.mxu0 0.0
    %1337 = vmatpush1.xpose.msra.mxu0 0.0
    %1338 = vmatprep.subr.mxu0 0.0
    %1339 = vmatpush1.xpose.msra.mxu0 0.0
    %1340 = vmatprep.subr.mxu0 0.0
    %1341 = vmatpush1.xpose.msra.mxu0 0.0
    %1342 = vmatprep.subr.mxu0 0.0
    %1343 = vmatpush1.xpose.msra.mxu0 0.0
    %1344 = vmatprep.subr.mxu0 0.0
    %1345 = vmatpush1.xpose.msra.mxu0 0.0
    %1346 = vmatprep.subr.mxu0 0.0
    %1347 = vmatpush1.xpose.msra.mxu0 0.0
    %1348 = vmatprep.subr.mxu0 0.0
    %1349 = vmatpush1.xpose.msra.mxu0 0.0
    %1350 = vmatprep.subr.mxu0 0.0
    %1351 = vmatpush1.xpose.msra.mxu0 0.0
    %1352 = vmatprep.subr.mxu0 0.0
    %1353 = vmatpush1.xpose.msra.mxu0 0.0
    %1354 = vmatprep.subr.mxu0 0.0
    %1355 = vmatpush1.xpose.msra.mxu0 0.0
    %1356 = vmatprep.subr.mxu0 0.0
    %1357 = vmatpush1.xpose.msra.mxu0 0.0
    %1358 = vmatprep.subr.mxu0 0.0
    %1359 = vmatpush1.xpose.msra.mxu0 0.0
    %1360 = vmatprep.subr.mxu0 0.0
    %1361 = vmatpush1.xpose.msra.mxu0 0.0
    %1362 = vmatprep.subr.mxu0 0.0
    %1363 = vmatpush1.xpose.msra.mxu0 0.0
    %1364 = vmatprep.subr.mxu0 0.0
    %1365 = vmatpush1.xpose.msra.mxu0 %v1334
    %1366 = vmatprep.subr.mxu0 0.0
    %1367 = vmatpush1.xpose.msra.mxu0 %v1331
    %1368 = vmatprep.subr.mxu0 0.0
    %1369 = vmatpush2.xpose.msra.mxu0 0.0
    %1370 = vmatprep.subr.mxu0 0.0
    %1371 = vmatpush2.xpose.msra.mxu0 0.0
    %1372 = vmatprep.subr.mxu0 0.0
    %1373 = vmatpush2.xpose.msra.mxu0 0.0
    %1374 = vmatprep.subr.mxu0 0.0
    %1375 = vmatpush2.xpose.msra.mxu0 0.0
    %1376 = vmatprep.subr.mxu0 0.0
    %1377 = vmatpush2.xpose.msra.mxu0 0.0
    %1378 = vmatprep.subr.mxu0 0.0
    %1379 = vmatpush2.xpose.msra.mxu0 0.0
    %1380 = vmatprep.subr.mxu0 0.0
    %1381 = vmatpush2.xpose.msra.mxu0 0.0
    %1382 = vmatprep.subr.mxu0 0.0
    %1383 = vmatpush2.xpose.msra.mxu0 0.0
    %1384 = vmatprep.subr.mxu0 0.0
    %1385 = vmatpush2.xpose.msra.mxu0 0.0
    %1386 = vmatprep.subr.mxu0 0.0
    %1387 = vmatpush2.xpose.msra.mxu0 0.0
    %1388 = vmatprep.subr.mxu0 0.0
    %1389 = vmatpush2.xpose.msra.mxu0 0.0
    %1390 = vmatprep.subr.mxu0 0.0
    %1391 = vmatpush2.xpose.msra.mxu0 0.0
    %1392 = vmatprep.subr.mxu0 0.0
    %1393 = vmatpush2.xpose.msra.mxu0 0.0
    %1394 = vmatprep.subr.mxu0 0.0
    %1395 = vmatpush2.xpose.msra.mxu0 0.0
    %1396 = vmatprep.subr.mxu0 0.0
    %1397 = vmatpush2.xpose.msra.mxu0 0.0
    %1398 = vmatprep.subr.mxu0 0.0
    %1399 = vmatpush2.xpose.msra.mxu0 0.0
    %1400 = vmatprep.mubr.f32.mxu0 0.0
    %1401 = vmatmul.mubr.f32.gmra.mxu0 %v1316
    %v1402 = vpop.f32.mrf.mxu0
    %v1403 = vadd.f32 0.0, %v1402
    %v1404 = vpop.f32.mrf.mxu0
    %1405 = vmatprep.mubr.f32.mxu0 0.0
    %1406 = vmatmul.mubr.f32.gmra.mxu0 %v1319
    %v1407 = vpop.f32.mrf.mxu0
    %v1408 = vadd.f32 0.0, %v1407
    %v1409 = vpop.f32.mrf.mxu0
    %1410 = vmatprep.mubr.f32.mxu0 0.0
    %1411 = vmatmul.mubr.f32.gmra.mxu0 %v1322
    %v1412 = vpop.f32.mrf.mxu0
    %v1413 = vadd.f32 0.0, %v1412
    %v1414 = vpop.f32.mrf.mxu0
    %1415 = vmatprep.mubr.f32.mxu0 0.0
    %1416 = vmatmul.mubr.f32.gmra.mxu0 %v1325
    %v1417 = vpop.f32.mrf.mxu0
    %v1418 = vadd.f32 0.0, %v1417
    %v1419 = vpop.f32.mrf.mxu0
    %1420 = vmatprep.mubr.f32.mxu0 0.0
    %1421 = vmatmul.mubr.f32.gmra.mxu0 %v1328
    %v1422 = vpop.f32.mrf.mxu0
    %v1423 = vadd.f32 0.0, %v1422
    %v1424 = vpop.f32.mrf.mxu0
    %1425 = vdwg.mxu0
    %v1426 = vsel %vm207, %v217, %v1403
    %v1427 = vsel %vm208, %v218, %v1408
    %v1428 = vsel %vm209, %v219, %v1413
    %v1429 = vsel %vm210, %v220, %v1418
    %v1430 = vsel %vm211, %v221, %v1423
    %v1431 = vsel %vm559, %v1426, -inf
    %1432 = vmax.xlane.f32.xlu0 %v1431
    %v1433 = vpop.xlane.xlu0 %1432
    %v1434 = vsel %vm559, %v1427, -inf
    %1435 = vmax.xlane.f32.xlu0 %v1434
    %v1436 = vpop.xlane.xlu0 %1435
    %v1437 = vsel %vm559, %v1428, -inf
    %1438 = vmax.xlane.f32.xlu0 %v1437
    %v1439 = vpop.xlane.xlu0 %1438
    %v1440 = vsel %vm559, %v1429, -inf
    %1441 = vmax.xlane.f32.xlu0 %v1440
    %v1442 = vpop.xlane.xlu0 %1441
    %v1443 = vsel %vm559, %v1430, -inf
    %1444 = vmax.xlane.f32.xlu0 %v1443
    %v1445 = vpop.xlane.xlu0 %1444
    %v1446 = vsub.f32 %v1426, %v1433
    %v1447 = vsub.f32 %v1427, %v1436
    %v1448 = vsub.f32 %v1428, %v1439
    %v1449 = vsub.f32 %v1429, %v1442
    %v1450 = vsub.f32 %v1430, %v1445
    %v1451 = vmul.f32 %v1446, 1.442695
    %v1452 = vpow.pop %v1451
    %v1453 = vmul.f32 %v1447, 1.442695
    %v1454 = vpow.pop %v1453
    %v1455 = vmul.f32 %v1448, 1.442695
    %v1456 = vpow.pop %v1455
    %v1457 = vmul.f32 %v1449, 1.442695
    %v1458 = vpow.pop %v1457
    %v1459 = vmul.f32 %v1450, 1.442695
    %v1460 = vpow.pop %v1459
    %v1461 = vsel %vm559, %v1452, 0.0
    %1462 = vadd.xlane.f32.xlu0 %v1461
    %v1463 = vpop.xlane.xlu0 %1462
    %v1464 = vsel %vm559, %v1454, 0.0
    %1465 = vadd.xlane.f32.xlu0 %v1464
    %v1466 = vpop.xlane.xlu0 %1465
    %v1467 = vsel %vm559, %v1456, 0.0
    %1468 = vadd.xlane.f32.xlu0 %v1467
    %v1469 = vpop.xlane.xlu0 %1468
    %v1470 = vsel %vm559, %v1458, 0.0
    %1471 = vadd.xlane.f32.xlu0 %v1470
    %v1472 = vpop.xlane.xlu0 %1471
    %v1473 = vsel %vm559, %v1460, 0.0
    %1474 = vadd.xlane.f32.xlu0 %v1473
    %v1475 = vpop.xlane.xlu0 %1474
    %v1476 = vrcp.pop %v1463
    %v1477 = vmul.f32 %v1452, %v1476
    %v1478 = vrcp.pop %v1466
    %v1479 = vmul.f32 %v1454, %v1478
    %v1480 = vrcp.pop %v1469
    %v1481 = vmul.f32 %v1456, %v1480
    %v1482 = vrcp.pop %v1472
    %v1483 = vmul.f32 %v1458, %v1482
    %v1484 = vrcp.pop %v1475
    %v1485 = vmul.f32 %v1460, %v1484
    %1486 = vst.msk [vmem:[%s4 + $0x28] sm:$0xff] %vm559, %v1477
    %1487 = vst.msk [vmem:[%s4 + $0x30] sm:$0xff] %vm559, %v1479
    %1488 = vst.msk [vmem:[%s4 + $0x38] sm:$0xff] %vm559, %v1481
    %1489 = vst.msk [vmem:[%s4 + $0x40] sm:$0xff] %vm559, %v1483
    %1490 = vst.msk [vmem:[%s4 + $0x48] sm:$0xff] %vm559, %v1485
    %v1492 = vsel %vm559, %v1477, 0
    %v1495 = vsel %vm559, %v1479, 0
    %v1498 = vsel %vm559, %v1481, 0
    %v1501 = vsel %vm559, %v1483, 0
    %v1504 = vsel %vm559, %v1485, 0
    %v1507 = vsel %vm160, %v1287, 0
    %1509 = vmatprep.subr.mxu0 0.0
    %1510 = vmatpush1.msra.mxu0 0.0
    %1511 = vmatprep.subr.mxu0 0.0
    %1512 = vmatpush1.msra.mxu0 0.0
    %1513 = vmatprep.subr.mxu0 0.0
    %1514 = vmatpush1.msra.mxu0 0.0
    %1515 = vmatprep.subr.mxu0 0.0
    %1516 = vmatpush1.msra.mxu0 0.0
    %1517 = vmatprep.subr.mxu0 0.0
    %1518 = vmatpush1.msra.mxu0 0.0
    %1519 = vmatprep.subr.mxu0 0.0
    %1520 = vmatpush1.msra.mxu0 0.0
    %1521 = vmatprep.subr.mxu0 0.0
    %1522 = vmatpush1.msra.mxu0 0.0
    %1523 = vmatprep.subr.mxu0 0.0
    %1524 = vmatpush1.msra.mxu0 0.0
    %1525 = vmatprep.subr.mxu0 0.0
    %1526 = vmatpush1.msra.mxu0 0.0
    %1527 = vmatprep.subr.mxu0 0.0
    %1528 = vmatpush1.msra.mxu0 0.0
    %1529 = vmatprep.subr.mxu0 0.0
    %1530 = vmatpush1.msra.mxu0 0.0
    %1531 = vmatprep.subr.mxu0 0.0
    %1532 = vmatpush1.msra.mxu0 0.0
    %1533 = vmatprep.subr.mxu0 0.0
    %1534 = vmatpush1.msra.mxu0 0.0
    %1535 = vmatprep.subr.mxu0 0.0
    %1536 = vmatpush1.msra.mxu0 0.0
    %1537 = vmatprep.subr.mxu0 0.0
    %1538 = vmatpush1.msra.mxu0 %v1507
    %1539 = vmatprep.subr.mxu0 0.0
    %1540 = vmatpush1.msra.mxu0 %v1282
    %1541 = vmatprep.subr.mxu0 0.0
    %1542 = vmatpush2.msra.mxu0 0.0
    %1543 = vmatprep.subr.mxu0 0.0
    %1544 = vmatpush2.msra.mxu0 0.0
    %1545 = vmatprep.subr.mxu0 0.0
    %1546 = vmatpush2.msra.mxu0 0.0
    %1547 = vmatprep.subr.mxu0 0.0
    %1548 = vmatpush2.msra.mxu0 0.0
    %1549 = vmatprep.subr.mxu0 0.0
    %1550 = vmatpush2.msra.mxu0 0.0
    %1551 = vmatprep.subr.mxu0 0.0
    %1552 = vmatpush2.msra.mxu0 0.0
    %1553 = vmatprep.subr.mxu0 0.0
    %1554 = vmatpush2.msra.mxu0 0.0
    %1555 = vmatprep.subr.mxu0 0.0
    %1556 = vmatpush2.msra.mxu0 0.0
    %1557 = vmatprep.subr.mxu0 0.0
    %1558 = vmatpush2.msra.mxu0 0.0
    %1559 = vmatprep.subr.mxu0 0.0
    %1560 = vmatpush2.msra.mxu0 0.0
    %1561 = vmatprep.subr.mxu0 0.0
    %1562 = vmatpush2.msra.mxu0 0.0
    %1563 = vmatprep.subr.mxu0 0.0
    %1564 = vmatpush2.msra.mxu0 0.0
    %1565 = vmatprep.subr.mxu0 0.0
    %1566 = vmatpush2.msra.mxu0 0.0
    %1567 = vmatprep.subr.mxu0 0.0
    %1568 = vmatpush2.msra.mxu0 0.0
    %1569 = vmatprep.subr.mxu0 0.0
    %1570 = vmatpush2.msra.mxu0 0.0
    %1571 = vmatprep.subr.mxu0 0.0
    %1572 = vmatpush2.msra.mxu0 0.0
    %1573 = vmatprep.mubr.f32.mxu0 0.0
    %1574 = vmatmul.mubr.f32.gmra.mxu0 %v1492
    %v1575 = vpop.f32.mrf.mxu0
    %v1576 = vadd.f32 0.0, %v1575
    %v1577 = vpop.f32.mrf.mxu0
    %1578 = vmatprep.mubr.f32.mxu0 0.0
    %1579 = vmatmul.mubr.f32.gmra.mxu0 %v1495
    %v1580 = vpop.f32.mrf.mxu0
    %v1581 = vadd.f32 0.0, %v1580
    %v1582 = vpop.f32.mrf.mxu0
    %1583 = vmatprep.mubr.f32.mxu0 0.0
    %1584 = vmatmul.mubr.f32.gmra.mxu0 %v1498
    %v1585 = vpop.f32.mrf.mxu0
    %v1586 = vadd.f32 0.0, %v1585
    %v1587 = vpop.f32.mrf.mxu0
    %1588 = vmatprep.mubr.f32.mxu0 0.0
    %1589 = vmatmul.mubr.f32.gmra.mxu0 %v1501
    %v1590 = vpop.f32.mrf.mxu0
    %v1591 = vadd.f32 0.0, %v1590
    %v1592 = vpop.f32.mrf.mxu0
    %1593 = vmatprep.mubr.f32.mxu0 0.0
    %1594 = vmatmul.mubr.f32.gmra.mxu0 %v1504
    %v1595 = vpop.f32.mrf.mxu0
    %v1596 = vadd.f32 0.0, %v1595
    %v1597 = vpop.f32.mrf.mxu0
    %1598 = vdwg.mxu0
    %v1599 = vmul.f32 %v1576, %v144
    %v1600 = vmul.f32 %v1581, %v161
    %v1601 = vmul.f32 %v1586, %v163
    %v1602 = vmul.f32 %v1591, %v165
    %v1603 = vmul.f32 %v1596, %v159
    %v1606 = vrot.slane %v1600, 2
    %v1607 = vrot.slane %v1601, 2
    %v1608 = vsel %vm164, %v1606, %v1607
    %v1611 = vadd.f32 %v1599, %v1608
    %v1612 = vadd.f32 %v1600, %v1607
    %v1614 = vrot.slane %v1601, 4
    %v1615 = vrot.slane %v1602, 4
    %v1616 = vsel %vm162, %v1614, %v1615
    %v1619 = vadd.f32 %v1611, %v1616
    %v1620 = vadd.f32 %v1612, %v1615
    %v1622 = vrot.slane %v1602, 6
    %v1623 = vrot.slane %v1603, 6
    %v1624 = vsel %vm160, %v1622, %v1623
    %v1627 = vadd.f32 %v1619, %v1624
    %v1628 = vadd.f32 %v1620, %v1623
    %v1629 = vld [vmem:[%s1094 + $0x18] sm:$0xff]
    %v1630 = vld [vmem:[%s1094 + $0x48] sm:$0xff]
    %v1631 = vld [vmem:[%s1094 + $0x78] sm:$0xff]
    %v1632 = vld [vmem:[%s1094 + $0xa8] sm:$0xff]
    %v1634 = vsel %vm259, %v1627, 0
    %v1637 = vsel %vm259, %v1628, 0
    %1639 = vmatprep.subr.mxu0 0.0
    %1640 = vmatpush1.msra.mxu0 0.0
    %1641 = vmatprep.subr.mxu0 0.0
    %1642 = vmatpush1.msra.mxu0 0.0
    %1643 = vmatprep.subr.mxu0 0.0
    %1644 = vmatpush1.msra.mxu0 0.0
    %1645 = vmatprep.subr.mxu0 0.0
    %1646 = vmatpush1.msra.mxu0 0.0
    %1647 = vmatprep.subr.mxu0 0.0
    %1648 = vmatpush1.msra.mxu0 0.0
    %1649 = vmatprep.subr.mxu0 0.0
    %1650 = vmatpush1.msra.mxu0 0.0
    %1651 = vmatprep.subr.mxu0 0.0
    %1652 = vmatpush1.msra.mxu0 0.0
    %1653 = vmatprep.subr.mxu0 0.0
    %1654 = vmatpush1.msra.mxu0 0.0
    %1655 = vmatprep.subr.mxu0 0.0
    %1656 = vmatpush1.msra.mxu0 0.0
    %1657 = vmatprep.subr.mxu0 0.0
    %1658 = vmatpush1.msra.mxu0 0.0
    %1659 = vmatprep.subr.mxu0 0.0
    %1660 = vmatpush1.msra.mxu0 0.0
    %1661 = vmatprep.subr.mxu0 0.0
    %1662 = vmatpush1.msra.mxu0 0.0
    %1663 = vmatprep.subr.mxu0 0.0
    %1664 = vmatpush1.msra.mxu0 %v1632
    %1665 = vmatprep.subr.mxu0 0.0
    %1666 = vmatpush1.msra.mxu0 %v1631
    %1667 = vmatprep.subr.mxu0 0.0
    %1668 = vmatpush1.msra.mxu0 %v1630
    %1669 = vmatprep.subr.mxu0 0.0
    %1670 = vmatpush1.msra.mxu0 %v1629
    %1671 = vmatprep.subr.mxu0 0.0
    %1672 = vmatpush2.msra.mxu0 0.0
    %1673 = vmatprep.subr.mxu0 0.0
    %1674 = vmatpush2.msra.mxu0 0.0
    %1675 = vmatprep.subr.mxu0 0.0
    %1676 = vmatpush2.msra.mxu0 0.0
    %1677 = vmatprep.subr.mxu0 0.0
    %1678 = vmatpush2.msra.mxu0 0.0
    %1679 = vmatprep.subr.mxu0 0.0
    %1680 = vmatpush2.msra.mxu0 0.0
    %1681 = vmatprep.subr.mxu0 0.0
    %1682 = vmatpush2.msra.mxu0 0.0
    %1683 = vmatprep.subr.mxu0 0.0
    %1684 = vmatpush2.msra.mxu0 0.0
    %1685 = vmatprep.subr.mxu0 0.0
    %1686 = vmatpush2.msra.mxu0 0.0
    %1687 = vmatprep.subr.mxu0 0.0
    %1688 = vmatpush2.msra.mxu0 0.0
    %1689 = vmatprep.subr.mxu0 0.0
    %1690 = vmatpush2.msra.mxu0 0.0
    %1691 = vmatprep.subr.mxu0 0.0
    %1692 = vmatpush2.msra.mxu0 0.0
    %1693 = vmatprep.subr.mxu0 0.0
    %1694 = vmatpush2.msra.mxu0 0.0
    %1695 = vmatprep.subr.mxu0 0.0
    %1696 = vmatpush2.msra.mxu0 0.0
    %1697 = vmatprep.subr.mxu0 0.0
    %1698 = vmatpush2.msra.mxu0 0.0
    %1699 = vmatprep.subr.mxu0 0.0
    %1700 = vmatpush2.msra.mxu0 0.0
    %1701 = vmatprep.subr.mxu0 0.0
    %1702 = vmatpush2.msra.mxu0 0.0
    %1703 = vmatprep.mubr.f32.mxu0 0.0
    %1704 = vmatmul.mubr.f32.gmra.mxu0 %v1634
    %v1705 = vpop.f32.mrf.mxu0
    %v1706 = vadd.f32 %v1097, %v1705
    %v1707 = vpop.f32.mrf.mxu0
    %1708 = vmatprep.mubr.f32.mxu0 0.0
    %1709 = vmatmul.mubr.f32.gmra.mxu0 %v1637
    %v1710 = vpop.f32.mrf.mxu0
    %v1711 = vadd.f32 %v1097, %v1710
    %v1712 = vpop.f32.mrf.mxu0
    %1713 = vdwg.mxu0
    %v1714 = vadd.f32 %v1706, %v1092
    %v1715 = vadd.f32 %v1711, %v1093
    %v1716 = vsel %vm259, %v1714, 0.0
    %1717 = vadd.xlane.f32.xlu0 %v1716
    %v1718 = vpop.xlane.xlu0 %1717
    %v1719 = vsel %vm848, %v1715, 0.0
    %1720 = vadd.xlane.f32.xlu0 %v1719
    %v1721 = vpop.xlane.xlu0 %1720
    %v1722 = vmul.f32 %v1718, %v852
    %v1723 = vmul.f32 %v1721, %v852
    %v1724 = vsub.f32 %v1714, %v1722
    %v1725 = vsub.f32 %v1715, %v1723
    %v1726 = vmul.f32 %v1724, %v1724
    %v1727 = vmul.f32 %v1725, %v1725
    %v1728 = vsel %vm259, %v1726, 0.0
    %1729 = vadd.xlane.f32.xlu0 %v1728
    %v1730 = vpop.xlane.xlu0 %1729
    %v1731 = vsel %vm848, %v1727, 0.0
    %1732 = vadd.xlane.f32.xlu0 %v1731
    %v1733 = vpop.xlane.xlu0 %1732
    %v1734 = vmul.f32 %v1730, %v852
    %v1735 = vmul.f32 %v1733, %v852
    %v1736 = vadd.f32 %v1734, 1e-05
    %v1737 = vadd.f32 %v1735, 1e-05
    %v1738 = vrsqrt.pop %v1736
    %v1739 = vrsqrt.pop %v1737
    %v1740 = vmul.f32 %v1724, %v1738
    %v1741 = vmul.f32 %v1725, %v1739
    %v1742 = vmul.f32 %v1740, %v1098
    %v1743 = vmul.f32 %v1741, %v1098
    %v1744 = vadd.f32 %v1742, %v1099
    %v1745 = vadd.f32 %v1743, %v1099
    %v1746 = vld [vmem:[%s1094 + $0x20] sm:$0xff]
    %v1747 = vld [vmem:[%s1094 + $0x50] sm:$0xff]
    %v1748 = vld [vmem:[%s1094 + $0x80] sm:$0xff]
    %v1749 = vld [vmem:[%s1094 + $0xb0] sm:$0xff]
    %v1751 = vsel %vm259, %v1744, 0
    %v1754 = vsel %vm259, %v1745, 0
    %1756 = vmatprep.subr.mxu0 0.0
    %1757 = vmatpush1.msra.mxu0 0.0
    %1758 = vmatprep.subr.mxu0 0.0
    %1759 = vmatpush1.msra.mxu0 0.0
    %1760 = vmatprep.subr.mxu0 0.0
    %1761 = vmatpush1.msra.mxu0 0.0
    %1762 = vmatprep.subr.mxu0 0.0
    %1763 = vmatpush1.msra.mxu0 0.0
    %1764 = vmatprep.subr.mxu0 0.0
    %1765 = vmatpush1.msra.mxu0 0.0
    %1766 = vmatprep.subr.mxu0 0.0
    %1767 = vmatpush1.msra.mxu0 0.0
    %1768 = vmatprep.subr.mxu0 0.0
    %1769 = vmatpush1.msra.mxu0 0.0
    %1770 = vmatprep.subr.mxu0 0.0
    %1771 = vmatpush1.msra.mxu0 0.0
    %1772 = vmatprep.subr.mxu0 0.0
    %1773 = vmatpush1.msra.mxu0 0.0
    %1774 = vmatprep.subr.mxu0 0.0
    %1775 = vmatpush1.msra.mxu0 0.0
    %1776 = vmatprep.subr.mxu0 0.0
    %1777 = vmatpush1.msra.mxu0 0.0
    %1778 = vmatprep.subr.mxu0 0.0
    %1779 = vmatpush1.msra.mxu0 0.0
    %1780 = vmatprep.subr.mxu0 0.0
    %1781 = vmatpush1.msra.mxu0 %v1749
    %1782 = vmatprep.subr.mxu0 0.0
    %1783 = vmatpush1.msra.mxu0 %v1748
    %1784 = vmatprep.subr.mxu0 0.0
    %1785 = vmatpush1.msra.mxu0 %v1747
    %1786 = vmatprep.subr.mxu0 0.0
    %1787 = vmatpush1.msra.mxu0 %v1746
    %1788 = vmatprep.subr.mxu0 0.0
    %1789 = vmatpush2.msra.mxu0 0.0
    %1790 = vmatprep.subr.mxu0 0.0
    %1791 = vmatpush2.msra.mxu0 0.0
    %1792 = vmatprep.subr.mxu0 0.0
    %1793 = vmatpush2.msra.mxu0 0.0
    %1794 = vmatprep.subr.mxu0 0.0
    %1795 = vmatpush2.msra.mxu0 0.0
    %1796 = vmatprep.subr.mxu0 0.0
    %1797 = vmatpush2.msra.mxu0 0.0
    %1798 = vmatprep.subr.mxu0 0.0
    %1799 = vmatpush2.msra.mxu0 0.0
    %1800 = vmatprep.subr.mxu0 0.0
    %1801 = vmatpush2.msra.mxu0 0.0
    %1802 = vmatprep.subr.mxu0 0.0
    %1803 = vmatpush2.msra.mxu0 0.0
    %1804 = vmatprep.subr.mxu0 0.0
    %1805 = vmatpush2.msra.mxu0 0.0
    %1806 = vmatprep.subr.mxu0 0.0
    %1807 = vmatpush2.msra.mxu0 0.0
    %1808 = vmatprep.subr.mxu0 0.0
    %1809 = vmatpush2.msra.mxu0 0.0
    %1810 = vmatprep.subr.mxu0 0.0
    %1811 = vmatpush2.msra.mxu0 0.0
    %1812 = vmatprep.subr.mxu0 0.0
    %1813 = vmatpush2.msra.mxu0 0.0
    %1814 = vmatprep.subr.mxu0 0.0
    %1815 = vmatpush2.msra.mxu0 0.0
    %1816 = vmatprep.subr.mxu0 0.0
    %1817 = vmatpush2.msra.mxu0 0.0
    %1818 = vmatprep.subr.mxu0 0.0
    %1819 = vmatpush2.msra.mxu0 0.0
    %1820 = vmatprep.mubr.f32.mxu0 0.0
    %1821 = vmatmul.mubr.f32.gmra.mxu0 %v1751
    %v1822 = vpop.f32.mrf.mxu0
    %v1823 = vadd.f32 %v1100, %v1822
    %v1824 = vpop.f32.mrf.mxu0
    %1825 = vmatprep.mubr.f32.mxu0 0.0
    %1826 = vmatmul.mubr.f32.gmra.mxu0 %v1754
    %v1827 = vpop.f32.mrf.mxu0
    %v1828 = vadd.f32 %v1100, %v1827
    %v1829 = vpop.f32.mrf.mxu0
    %1830 = vdwg.mxu0
    %v1831 = vmax.f32 %v1823, 0.0
    %v1832 = vmax.f32 %v1828, 0.0
    %v1833 = vld [vmem:[%s1094 + $0x28] sm:$0xff]
    %v1834 = vld [vmem:[%s1094 + $0x58] sm:$0xff]
    %v1835 = vld [vmem:[%s1094 + $0x88] sm:$0xff]
    %v1836 = vld [vmem:[%s1094 + $0xb8] sm:$0xff]
    %v1838 = vsel %vm968, %v1831, 0
    %v1841 = vsel %vm968, %v1832, 0
    %v1844 = vsel %vm968, %v1833, 0
    %v1847 = vsel %vm968, %v1834, 0
    %v1850 = vsel %vm968, %v1835, 0
    %v1853 = vsel %vm968, %v1836, 0
    %1855 = vmatprep.subr.mxu0 0.0
    %1856 = vmatpush1.xpose.msra.mxu0 0.0
    %1857 = vmatprep.subr.mxu0 0.0
    %1858 = vmatpush1.xpose.msra.mxu0 0.0
    %1859 = vmatprep.subr.mxu0 0.0
    %1860 = vmatpush1.xpose.msra.mxu0 0.0
    %1861 = vmatprep.subr.mxu0 0.0
    %1862 = vmatpush1.xpose.msra.mxu0 0.0
    %1863 = vmatprep.subr.mxu0 0.0
    %1864 = vmatpush1.xpose.msra.mxu0 0.0
    %1865 = vmatprep.subr.mxu0 0.0
    %1866 = vmatpush1.xpose.msra.mxu0 0.0
    %1867 = vmatprep.subr.mxu0 0.0
    %1868 = vmatpush1.xpose.msra.mxu0 0.0
    %1869 = vmatprep.subr.mxu0 0.0
    %1870 = vmatpush1.xpose.msra.mxu0 0.0
    %1871 = vmatprep.subr.mxu0 0.0
    %1872 = vmatpush1.xpose.msra.mxu0 0.0
    %1873 = vmatprep.subr.mxu0 0.0
    %1874 = vmatpush1.xpose.msra.mxu0 0.0
    %1875 = vmatprep.subr.mxu0 0.0
    %1876 = vmatpush1.xpose.msra.mxu0 0.0
    %1877 = vmatprep.subr.mxu0 0.0
    %1878 = vmatpush1.xpose.msra.mxu0 0.0
    %1879 = vmatprep.subr.mxu0 0.0
    %1880 = vmatpush1.xpose.msra.mxu0 %v1853
    %1881 = vmatprep.subr.mxu0 0.0
    %1882 = vmatpush1.xpose.msra.mxu0 %v1850
    %1883 = vmatprep.subr.mxu0 0.0
    %1884 = vmatpush1.xpose.msra.mxu0 %v1847
    %1885 = vmatprep.subr.mxu0 0.0
    %1886 = vmatpush1.xpose.msra.mxu0 %v1844
    %1887 = vmatprep.subr.mxu0 0.0
    %1888 = vmatpush2.xpose.msra.mxu0 0.0
    %1889 = vmatprep.subr.mxu0 0.0
    %1890 = vmatpush2.xpose.msra.mxu0 0.0
    %1891 = vmatprep.subr.mxu0 0.0
    %1892 = vmatpush2.xpose.msra.mxu0 0.0
    %1893 = vmatprep.subr.mxu0 0.0
    %1894 = vmatpush2.xpose.msra.mxu0 0.0
    %1895 = vmatprep.subr.mxu0 0.0
    %1896 = vmatpush2.xpose.msra.mxu0 0.0
    %1897 = vmatprep.subr.mxu0 0.0
    %1898 = vmatpush2.xpose.msra.mxu0 0.0
    %1899 = vmatprep.subr.mxu0 0.0
    %1900 = vmatpush2.xpose.msra.mxu0 0.0
    %1901 = vmatprep.subr.mxu0 0.0
    %1902 = vmatpush2.xpose.msra.mxu0 0.0
    %1903 = vmatprep.subr.mxu0 0.0
    %1904 = vmatpush2.xpose.msra.mxu0 0.0
    %1905 = vmatprep.subr.mxu0 0.0
    %1906 = vmatpush2.xpose.msra.mxu0 0.0
    %1907 = vmatprep.subr.mxu0 0.0
    %1908 = vmatpush2.xpose.msra.mxu0 0.0
    %1909 = vmatprep.subr.mxu0 0.0
    %1910 = vmatpush2.xpose.msra.mxu0 0.0
    %1911 = vmatprep.subr.mxu0 0.0
    %1912 = vmatpush2.xpose.msra.mxu0 0.0
    %1913 = vmatprep.subr.mxu0 0.0
    %1914 = vmatpush2.xpose.msra.mxu0 0.0
    %1915 = vmatprep.subr.mxu0 0.0
    %1916 = vmatpush2.xpose.msra.mxu0 0.0
    %1917 = vmatprep.subr.mxu0 0.0
    %1918 = vmatpush2.xpose.msra.mxu0 0.0
    %1919 = vmatprep.mubr.f32.mxu0 0.0
    %1920 = vmatmul.mubr.f32.gmra.mxu0 %v1838
    %v1921 = vpop.f32.mrf.mxu0
    %v1922 = vadd.f32 %v1101, %v1921
    %v1923 = vpop.f32.mrf.mxu0
    %1924 = vmatprep.mubr.f32.mxu0 0.0
    %1925 = vmatmul.mubr.f32.gmra.mxu0 %v1841
    %v1926 = vpop.f32.mrf.mxu0
    %v1927 = vadd.f32 %v1101, %v1926
    %v1928 = vpop.f32.mrf.mxu0
    %1929 = vdwg.mxu0
    %v1930 = vadd.f32 %v1922, %v1744
    %v1931 = vadd.f32 %v1927, %v1745
    %v1932 = vsel %vm259, %v1930, 0.0
    %1933 = vadd.xlane.f32.xlu0 %v1932
    %v1934 = vpop.xlane.xlu0 %1933
    %v1935 = vsel %vm848, %v1931, 0.0
    %1936 = vadd.xlane.f32.xlu0 %v1935
    %v1937 = vpop.xlane.xlu0 %1936
    %v1938 = vmul.f32 %v1934, %v852
    %v1939 = vmul.f32 %v1937, %v852
    %v1940 = vsub.f32 %v1930, %v1938
    %v1941 = vsub.f32 %v1931, %v1939
    %v1942 = vmul.f32 %v1940, %v1940
    %v1943 = vmul.f32 %v1941, %v1941
    %v1944 = vsel %vm259, %v1942, 0.0
    %1945 = vadd.xlane.f32.xlu0 %v1944
    %v1946 = vpop.xlane.xlu0 %1945
    %v1947 = vsel %vm848, %v1943, 0.0
    %1948 = vadd.xlane.f32.xlu0 %v1947
    %v1949 = vpop.xlane.xlu0 %1948
    %v1950 = vmul.f32 %v1946, %v852
    %v1951 = vmul.f32 %v1949, %v852
    %v1952 = vadd.f32 %v1950, 1e-05
    %v1953 = vadd.f32 %v1951, 1e-05
    %v1954 = vrsqrt.pop %v1952
    %v1955 = vrsqrt.pop %v1953
    %v1956 = vmul.f32 %v1940, %v1954
    %v1957 = vmul.f32 %v1941, %v1955
    %v1958 = vmul.f32 %v1956, %v1102
    %v1959 = vmul.f32 %v1957, %v1102
    %v1960 = vadd.f32 %v1958, %v1103
    %v1961 = vadd.f32 %v1959, %v1103
    %v1962 = vsel %vm160, %v1961, 0.0
    %1963 = vst.msk [vmem:[%s3] sm:$0xff] %vm259, %v1960
    %1964 = vst.msk [vmem:[%s3 + $0x8] sm:$0xff] %vm259, %v1962
    // Predicated region
    $region18: #{transformer_encoder.1} parent=1 // pred_check
      _
    $region19: #{transformer_encoder.1} parent=1 // pred_check_branch
      %1966 = sbr.rel (0) target = $region21
    $region20: #{transformer_encoder.1} parent=1 // pred_region
      _
    $region21: #{transformer_encoder.1} parent=1 // pred_fallthru
      _
    // Predicated region
    $region22: #{transformer_encoder.1} parent=1 // pred_check
      _
    $region23: #{transformer_encoder.1} parent=1 // pred_check_branch
      %1968 = sbr.rel (0) target = $region25
    $region24: #{transformer_encoder.1} parent=1 // pred_region
      _
    $region25: #{transformer_encoder.1} parent=1 // pred_fallthru
      _
    // Predicated region
    $region26: #{transformer_encoder.1} parent=1 // pred_check
      _
    $region27: #{transformer_encoder.1} parent=1 // pred_check_branch
      %1970 = sbr.rel (0) target = $region29
    $region28: #{transformer_encoder.1} parent=1 // pred_region
      _
    $region29: #{transformer_encoder.1} parent=1 // pred_fallthru
      _
    // Predicated region
    $region30: #{transformer_encoder.1} parent=1 // pred_check
      _
    $region31: #{transformer_encoder.1} parent=1 // pred_check_branch
      %1972 = sbr.rel (0) target = $region33
    $region32: #{transformer_encoder.1} parent=1 // pred_region
      _
    $region33: #{transformer_encoder.1} parent=1 // pred_fallthru
      _
    %1973 = vsyncpa [#allocation3], 1

</llo_original>
